<compile_context>
chip_gen: v5e
topology: v5e:2x2
jax: 0.10.0
libtpu: 0.0.40
codegen_flags: <defaults>
</compile_context>

<pallas_src>
import functools

import numpy as np
import jax
import jax.numpy as jnp
from jax.experimental import pallas as pl
from jax.experimental.pallas import tpu as pltpu


# --------------------------------------------------------------------------- #
# Fused kernel (one batch per grid step):                                      #
#   1x1 conv -> activations -> normalize fold -> pixel-shuffle upsample (MXU)  #
#   -> plane->depth (EUP reciprocal) -> separable bilinear downsample (MXU)    #
# --------------------------------------------------------------------------- #
def plane_depth_kernel(x_ref, w_ref, b_ref, u_ref, v_ref,
                       rw_ref, rh_ref, wy_ref, wxt_ref,
                       depth_ref, ds_ref):
    # x_ref     : VMEM (C, H, W)     one batch of features
    # w_ref     : SMEM (4, C)        1x1-conv weight (scalars)
    # b_ref     : SMEM (4,)          1x1-conv bias   (scalars)
    # u_ref     : VMEM (1, upW)      (ow % up - off) / focal[b]
    # v_ref     : VMEM (upH, 1)      (oh % up - off) / focal[b]
    # rw_ref    : VMEM (W, upW)      exact 0/1 lane-repeat matrix
    # rh_ref    : VMEM (upH, H)      exact 0/1 sublane-repeat matrix
    # wy_ref    : VMEM (OH, upH)     bilinear (align_corners=True) row-interp
    # wxt_ref   : VMEM (upW, OW)     bilinear (align_corners=True) col-interp (transposed)
    # depth_ref : VMEM (upH, upW)    depth / max_depth   (already NCHW-interleaved)
    # ds_ref    : VMEM (OH, OW)      downsampled depth / max_depth
    C = x_ref.shape[0]
    H = x_ref.shape[1]

    # ---- 1x1 conv: contraction dim is only C = 4 -> full-slab VPU MACs with SMEM scalars.
    xs = [x_ref[ci] for ci in range(C)]                       # each (H, W)

    def conv_out(co):
        acc = xs[0] * w_ref[co, 0]
        for ci in range(1, C):
            acc = acc + xs[ci] * w_ref[co, ci]
        return acc + b_ref[co]

    nx = jnp.tanh(conv_out(0))
    ny = jnp.tanh(conv_out(1))
    nz = jax.nn.sigmoid(conv_out(2))
    sg = jax.nn.sigmoid(conv_out(3))

    # F.normalize(p=2, dim=1, eps=1e-12) and max_depth folded algebraically:
    #   depth/max_depth = sigmoid(y3) * max(||n||, eps) * tmp / (nx*u + ny*v + nz)
    norm = jnp.maximum(jnp.sqrt(nx * nx + ny * ny + nz * nz), 1e-12)
    dn = sg * norm

    # ---- Nearest (pixel-shuffle) upsample of the 4 plane-param slabs via exact 0/1
    #      matrices on the MXU: values are only multiplied by 1.0 / 0.0, so this is an
    #      exact relayout.  Stack the params so the first dot gets a (4H, W) LHS.
    cat = jnp.concatenate([nx, ny, nz, dn], axis=0)                        # (4H, W)
    cat_w = jnp.dot(cat, rw_ref[...], preferred_element_type=jnp.float32)  # (4H, upW)
    rh = rh_ref[...]

    def up_rows(i):                                                        # (upH, upW)
        return jnp.dot(rh, cat_w[i * H:(i + 1) * H, :],
                       preferred_element_type=jnp.float32)

    nx_u, ny_u, nz_u, dn_u = up_rows(0), up_rows(1), up_rows(2), up_rows(3)

    # ---- Plane -> depth at full resolution (per-batch u/v row & column vectors).
    u = u_ref[...]                                  # (1, upW)
    v = v_ref[...]                                  # (upH, 1)
    tmp = jnp.sqrt(u * u + v * v + 1.0)             # (upH, upW)
    denom = nx_u * u + ny_u * v + nz_u
    numer = dn_u * tmp
    # NOTE: denom ~= sigmoid(nz) > 0 for sane focal lengths; a degenerate denom -> 0
    # would give NaN here where an exact divide gives +/-inf (same as the review noted).
    r = pl.reciprocal(denom, approx=True)
    r = r * (2.0 - denom * r)                       # one Newton step -> ~f32 accurate
    depth = numer * r                               # (upH, upW), already / max_depth
    depth_ref[...] = depth

    # ---- Separable bilinear (align_corners=True) downsample on the MXU.
    rowi = jnp.dot(wy_ref[...], depth, preferred_element_type=jnp.float32)      # (OH, upW)
    ds_ref[...] = jnp.dot(rowi, wxt_ref[...], preferred_element_type=jnp.float32)  # (OH, OW)


# --------------------------------------------------------------------------- #
# Host-side constants                                                          #
# --------------------------------------------------------------------------- #
def _make_interp_matrix(in_size, out_size):
    """Row-interpolation matrix for F.interpolate(mode='bilinear', align_corners=True)."""
    W = np.zeros((out_size, in_size), dtype=np.float64)
    if out_size == 1:
        W[0, 0] = 1.0
        return W.astype(np.float32)
    scale = (in_size - 1) / (out_size - 1)
    for o in range(out_size):
        src = o * scale
        i0 = min(int(np.floor(src)), in_size - 1)
        i1 = min(i0 + 1, in_size - 1)
        w1 = src - i0
        W[o, i0] += 1.0 - w1
        W[o, i1] += w1
    return W.astype(np.float32)


# --------------------------------------------------------------------------- #
# Wrapper: constant prep + one pallas_call (grid over batch) + channel axis    #
# --------------------------------------------------------------------------- #
def plane_depth_forward(x, focal, downratio, conv_w, conv_b, *, input_size, upratio,
                        max_depth=80.0):
    B, C, H, W = x.shape
    assert (H, W) == tuple(input_size), ("math size should be", input_size, (H, W))
    assert C == 4, "this instantiation uses channel=4 (plane_conv == one 1x1 conv)"
    del max_depth  # cancels exactly in depth_scaled; kept in the signature for API parity

    f32 = jnp.float32
    up = int(upratio)
    upH, upW = H * up, W * up
    OH = int(np.floor(upH / downratio))
    OW = int(np.floor(upW / downratio))

    # Per-batch sub-pixel camera offsets as a lane row / sublane column vector.
    off = (up - 1) / 2.0
    inv_f = 1.0 / focal.astype(f32)                                   # (B,)
    du = (jnp.arange(upW, dtype=f32) % up) - off                      # (upW,)
    dv = (jnp.arange(upH, dtype=f32) % up) - off                      # (upH,)
    urow = (inv_f[:, None] * du[None, :]).reshape(B, 1, upW)
    vcol = (inv_f[:, None] * dv[None, :]).reshape(B, upH, 1)

    # Exact 0/1 pixel-shuffle (nearest-up) matrices and separable bilinear matrices.
    Rw = np.zeros((W, upW), np.float32)
    Rw[np.arange(upW) // up, np.arange(upW)] = 1.0
    Rh = np.zeros((upH, H), np.float32)
    Rh[np.arange(upH), np.arange(upH) // up] = 1.0
    Wy = _make_interp_matrix(upH, OH)                                 # (OH, upH)
    WxT = _make_interp_matrix(upW, OW).T.copy()                       # (upW, OW)

    smem = pl.BlockSpec(memory_space=pltpu.MemorySpace.SMEM)
    depth, ds = pl.pallas_call(
        plane_depth_kernel,
        grid=(B,),
        out_shape=(jax.ShapeDtypeStruct((B, upH, upW), f32),
                   jax.ShapeDtypeStruct((B, OH, OW), f32)),
        in_specs=[
            pl.BlockSpec((None, C, H, W), lambda b: (b, 0, 0, 0)),    # x        (per batch)
            smem,                                                     # conv_w   (scalars)
            smem,                                                     # conv_b   (scalars)
            pl.BlockSpec((None, 1, upW), lambda b: (b, 0, 0)),        # urow     (per batch)
            pl.BlockSpec((None, upH, 1), lambda b: (b, 0, 0)),        # vcol     (per batch)
            pl.BlockSpec((W, upW), lambda b: (0, 0)),                 # Rw       (shared)
            pl.BlockSpec((upH, H), lambda b: (0, 0)),                 # Rh       (shared)
            pl.BlockSpec((OH, upH), lambda b: (0, 0)),                # Wy       (shared)
            pl.BlockSpec((upW, OW), lambda b: (0, 0)),                # WxT      (shared)
        ],
        out_specs=(pl.BlockSpec((None, upH, upW), lambda b: (b, 0, 0)),
                   pl.BlockSpec((None, OH, OW), lambda b: (b, 0, 0))),
        compiler_params=pltpu.CompilerParams(
            dimension_semantics=("parallel",),          # v7x: one batch per TensorCore
            vmem_limit_bytes=32 * 1024 * 1024),
    )(x.astype(f32), conv_w.astype(f32), conv_b.astype(f32),
      urow, vcol, jnp.asarray(Rw), jnp.asarray(Rh), jnp.asarray(Wy), jnp.asarray(WxT))

    # Only a free reshape remains (add the channel axis); no XLA transpose of the output.
    return depth[:, None], ds[:, None]


# --------------------------------------------------------------------------- #
# Pure-JAX / numpy references (exact elementwise paths)                        #
# --------------------------------------------------------------------------- #
def _ref_depth_scaled(x, focal, w, bias, upratio, max_depth):
    y = (w[None, :, :, None, None] * x[:, None, :, :, :]).sum(axis=2) \
        + bias[None, :, None, None]
    n = jnp.concatenate([jnp.tanh(y[:, 0:2]), jax.nn.sigmoid(y[:, 2:3])], axis=1)
    d = jax.nn.sigmoid(y[:, 3:4]) * max_depth
    n = n / jnp.maximum(jnp.linalg.norm(n, axis=1, keepdims=True), 1e-12)

    def up(t):
        return jnp.repeat(jnp.repeat(t, upratio, axis=1), upratio, axis=2)

    A, Bn, Cn, Dn = up(n[:, 0]), up(n[:, 1]), up(n[:, 2]), up(d[:, 0])
    H2 = x.shape[2] * upratio
    W2 = x.shape[3] * upratio
    v0 = (jnp.arange(H2) % upratio - (upratio - 1) / 2.0)[:, None]
    u0 = (jnp.arange(W2) % upratio - (upratio - 1) / 2.0)[None, :]
    f = focal[:, None, None]
    u, v = u0 / f, v0 / f
    tmp = jnp.sqrt(u * u + v * v + 1.0)
    depth = Dn * tmp / (A * u + Bn * v + Cn)
    return (depth / max_depth)[:, None]


if __name__ == "__main__":
    key = jax.random.PRNGKey(0)
    B, C, H, W = 2, 4, 16, 16
    upratio = 2
    downratio = 2
    max_depth = 80.0

    k1, k2, k3 = jax.random.split(key, 3)
    x = jax.random.normal(k1, (B, C, H, W), jnp.float32)
    focal = jnp.array([320.0, 400.0], jnp.float32)
    conv_w = 0.5 * jax.random.normal(k2, (4, C), jnp.float32)    # Conv2d(4, 4, 1) weight
    conv_b = 0.1 * jax.random.normal(k3, (4,), jnp.float32)      # Conv2d(4, 4, 1) bias

    fwd = jax.jit(
        functools.partial(plane_depth_forward, input_size=(H, W), upratio=upratio,
                          max_depth=max_depth),
        static_argnums=(2,))                                     # downratio is static
    depth_scaled, depth_scaled_ds = fwd(x, focal, downratio, conv_w, conv_b)
    jax.block_until_ready((depth_scaled, depth_scaled_ds))

    upH, upW = H * upratio, W * upratio
    OH, OW = upH // downratio, upW // downratio
    assert depth_scaled.shape == (B, 1, upH, upW)
    assert depth_scaled_ds.shape == (B, 1, OH, OW)
    assert bool(jnp.all(jnp.isfinite(depth_scaled)))
    assert bool(jnp.all(jnp.isfinite(depth_scaled_ds)))

    # Hot path check: conv + activations + normalize + plane->depth (scaled by 1/max_depth).
    # Margin covers the exact-0/1 MXU relayout (f32 multi-pass) + EUP transcendentals.
    ref = _ref_depth_scaled(x, focal, conv_w, conv_b, upratio, max_depth)
    np.testing.assert_allclose(np.asarray(depth_scaled), np.asarray(ref),
                               rtol=5e-4, atol=1e-5)

    # Separable bilinear (align_corners=True) downsample check (f64 reference).
    Wy = _make_interp_matrix(upH, OH)
    Wx = _make_interp_matrix(upW, OW)
    ref_ds = np.einsum('ah,bchw,dw->bcad', Wy.astype(np.float64),
                       np.asarray(ref, np.float64), Wx.astype(np.float64))
    np.testing.assert_allclose(np.asarray(depth_scaled_ds), ref_ds,
                               rtol=2e-3, atol=2e-4)

    print("KERNEL_OK")
</pallas_src>

<mosaic_0001>
module attributes {stable_mosaic.version = 11 : i64} {
  func.func @plane_depth_kernel(%arg0: i32, %arg1: memref<1x4x16x16xf32, #tpu.memory_space<vmem>>, %arg2: memref<4x4xf32, #tpu.memory_space<smem>>, %arg3: memref<4xf32, #tpu.memory_space<smem>>, %arg4: memref<1x1x32xf32, #tpu.memory_space<vmem>>, %arg5: memref<1x32x1xf32, #tpu.memory_space<vmem>>, %arg6: memref<16x32xf32, #tpu.memory_space<vmem>>, %arg7: memref<32x16xf32, #tpu.memory_space<vmem>>, %arg8: memref<16x32xf32, #tpu.memory_space<vmem>>, %arg9: memref<32x16xf32, #tpu.memory_space<vmem>>, %arg10: memref<1x32x32xf32, #tpu.memory_space<vmem>>, %arg11: memref<1x16x16xf32, #tpu.memory_space<vmem>>) attributes {dimension_semantics = [#tpu.dimension_semantics<parallel>], iteration_bounds = array<i64: 2>, scalar_prefetch = 0 : i64, scratch_operands = 0 : i64, tpu.core_type = #tpu.core_type<tc>, window_params = [{transform_indices = @transform_0, window_bounds = array<i64: 1, 4, 16, 16>}, {transform_indices = @transform_1, window_bounds = array<i64: 4, 4>}, {transform_indices = @transform_2, window_bounds = array<i64: 4>}, {transform_indices = @transform_3, window_bounds = array<i64: 1, 1, 32>}, {transform_indices = @transform_4, window_bounds = array<i64: 1, 32, 1>}, {pipeline_mode = #tpu.pipeline_mode<synchronous>, transform_indices = @transform_5, window_bounds = array<i64: 16, 32>}, {pipeline_mode = #tpu.pipeline_mode<synchronous>, transform_indices = @transform_6, window_bounds = array<i64: 32, 16>}, {pipeline_mode = #tpu.pipeline_mode<synchronous>, transform_indices = @transform_7, window_bounds = array<i64: 16, 32>}, {pipeline_mode = #tpu.pipeline_mode<synchronous>, transform_indices = @transform_8, window_bounds = array<i64: 32, 16>}, {transform_indices = @transform_9, window_bounds = array<i64: 1, 32, 32>}, {transform_indices = @transform_10, window_bounds = array<i64: 1, 16, 16>}]} {
    %c0 = arith.constant 0 : index
    %c0_0 = arith.constant 0 : index
    %c0_1 = arith.constant 0 : index
    %c0_2 = arith.constant 0 : index
    %0 = vector.load %arg1[%c0, %c0_0, %c0_1, %c0_2] : memref<1x4x16x16xf32, #tpu.memory_space<vmem>>, vector<1x1x16x16xf32>
    %1 = vector.shape_cast %0 : vector<1x1x16x16xf32> to vector<16x16xf32>
    %c0_3 = arith.constant 0 : index
    %c1 = arith.constant 1 : index
    %c0_4 = arith.constant 0 : index
    %c0_5 = arith.constant 0 : index
    %2 = vector.load %arg1[%c0_3, %c1, %c0_4, %c0_5] : memref<1x4x16x16xf32, #tpu.memory_space<vmem>>, vector<1x1x16x16xf32>
    %3 = vector.shape_cast %2 : vector<1x1x16x16xf32> to vector<16x16xf32>
    %c0_6 = arith.constant 0 : index
    %c2 = arith.constant 2 : index
    %c0_7 = arith.constant 0 : index
    %c0_8 = arith.constant 0 : index
    %4 = vector.load %arg1[%c0_6, %c2, %c0_7, %c0_8] : memref<1x4x16x16xf32, #tpu.memory_space<vmem>>, vector<1x1x16x16xf32>
    %5 = vector.shape_cast %4 : vector<1x1x16x16xf32> to vector<16x16xf32>
    %c0_9 = arith.constant 0 : index
    %c3 = arith.constant 3 : index
    %c0_10 = arith.constant 0 : index
    %c0_11 = arith.constant 0 : index
    %6 = vector.load %arg1[%c0_9, %c3, %c0_10, %c0_11] : memref<1x4x16x16xf32, #tpu.memory_space<vmem>>, vector<1x1x16x16xf32>
    %7 = vector.shape_cast %6 : vector<1x1x16x16xf32> to vector<16x16xf32>
    %c0_12 = arith.constant 0 : index
    %c0_13 = arith.constant 0 : index
    %8 = memref.load %arg2[%c0_12, %c0_13] : memref<4x4xf32, #tpu.memory_space<smem>>
    %9 = vector.broadcast %8 : f32 to vector<16x16xf32>
    %10 = arith.mulf %1, %9 : vector<16x16xf32>
    %c0_14 = arith.constant 0 : index
    %c1_15 = arith.constant 1 : index
    %11 = memref.load %arg2[%c0_14, %c1_15] : memref<4x4xf32, #tpu.memory_space<smem>>
    %12 = vector.broadcast %11 : f32 to vector<16x16xf32>
    %13 = arith.mulf %3, %12 : vector<16x16xf32>
    %14 = arith.addf %10, %13 : vector<16x16xf32>
    %c0_16 = arith.constant 0 : index
    %c2_17 = arith.constant 2 : index
    %15 = memref.load %arg2[%c0_16, %c2_17] : memref<4x4xf32, #tpu.memory_space<smem>>
    %16 = vector.broadcast %15 : f32 to vector<16x16xf32>
    %17 = arith.mulf %5, %16 : vector<16x16xf32>
    %18 = arith.addf %14, %17 : vector<16x16xf32>
    %c0_18 = arith.constant 0 : index
    %c3_19 = arith.constant 3 : index
    %19 = memref.load %arg2[%c0_18, %c3_19] : memref<4x4xf32, #tpu.memory_space<smem>>
    %20 = vector.broadcast %19 : f32 to vector<16x16xf32>
    %21 = arith.mulf %7, %20 : vector<16x16xf32>
    %22 = arith.addf %18, %21 : vector<16x16xf32>
    %c0_20 = arith.constant 0 : index
    %23 = memref.load %arg3[%c0_20] : memref<4xf32, #tpu.memory_space<smem>>
    %24 = vector.broadcast %23 : f32 to vector<16x16xf32>
    %25 = arith.addf %22, %24 : vector<16x16xf32>
    %26 = math.tanh %25 : vector<16x16xf32>
    %c1_21 = arith.constant 1 : index
    %c0_22 = arith.constant 0 : index
    %27 = memref.load %arg2[%c1_21, %c0_22] : memref<4x4xf32, #tpu.memory_space<smem>>
    %28 = vector.broadcast %27 : f32 to vector<16x16xf32>
    %29 = arith.mulf %1, %28 : vector<16x16xf32>
    %c1_23 = arith.constant 1 : index
    %c1_24 = arith.constant 1 : index
    %30 = memref.load %arg2[%c1_23, %c1_24] : memref<4x4xf32, #tpu.memory_space<smem>>
    %31 = vector.broadcast %30 : f32 to vector<16x16xf32>
    %32 = arith.mulf %3, %31 : vector<16x16xf32>
    %33 = arith.addf %29, %32 : vector<16x16xf32>
    %c1_25 = arith.constant 1 : index
    %c2_26 = arith.constant 2 : index
    %34 = memref.load %arg2[%c1_25, %c2_26] : memref<4x4xf32, #tpu.memory_space<smem>>
    %35 = vector.broadcast %34 : f32 to vector<16x16xf32>
    %36 = arith.mulf %5, %35 : vector<16x16xf32>
    %37 = arith.addf %33, %36 : vector<16x16xf32>
    %c1_27 = arith.constant 1 : index
    %c3_28 = arith.constant 3 : index
    %38 = memref.load %arg2[%c1_27, %c3_28] : memref<4x4xf32, #tpu.memory_space<smem>>
    %39 = vector.broadcast %38 : f32 to vector<16x16xf32>
    %40 = arith.mulf %7, %39 : vector<16x16xf32>
    %41 = arith.addf %37, %40 : vector<16x16xf32>
    %c1_29 = arith.constant 1 : index
    %42 = memref.load %arg3[%c1_29] : memref<4xf32, #tpu.memory_space<smem>>
    %43 = vector.broadcast %42 : f32 to vector<16x16xf32>
    %44 = arith.addf %41, %43 : vector<16x16xf32>
    %45 = math.tanh %44 : vector<16x16xf32>
    %c2_30 = arith.constant 2 : index
    %c0_31 = arith.constant 0 : index
    %46 = memref.load %arg2[%c2_30, %c0_31] : memref<4x4xf32, #tpu.memory_space<smem>>
    %47 = vector.broadcast %46 : f32 to vector<16x16xf32>
    %48 = arith.mulf %1, %47 : vector<16x16xf32>
    %c2_32 = arith.constant 2 : index
    %c1_33 = arith.constant 1 : index
    %49 = memref.load %arg2[%c2_32, %c1_33] : memref<4x4xf32, #tpu.memory_space<smem>>
    %50 = vector.broadcast %49 : f32 to vector<16x16xf32>
    %51 = arith.mulf %3, %50 : vector<16x16xf32>
    %52 = arith.addf %48, %51 : vector<16x16xf32>
    %c2_34 = arith.constant 2 : index
    %c2_35 = arith.constant 2 : index
    %53 = memref.load %arg2[%c2_34, %c2_35] : memref<4x4xf32, #tpu.memory_space<smem>>
    %54 = vector.broadcast %53 : f32 to vector<16x16xf32>
    %55 = arith.mulf %5, %54 : vector<16x16xf32>
    %56 = arith.addf %52, %55 : vector<16x16xf32>
    %c2_36 = arith.constant 2 : index
    %c3_37 = arith.constant 3 : index
    %57 = memref.load %arg2[%c2_36, %c3_37] : memref<4x4xf32, #tpu.memory_space<smem>>
    %58 = vector.broadcast %57 : f32 to vector<16x16xf32>
    %59 = arith.mulf %7, %58 : vector<16x16xf32>
    %60 = arith.addf %56, %59 : vector<16x16xf32>
    %c2_38 = arith.constant 2 : index
    %61 = memref.load %arg3[%c2_38] : memref<4xf32, #tpu.memory_space<smem>>
    %62 = vector.broadcast %61 : f32 to vector<16x16xf32>
    %63 = arith.addf %60, %62 : vector<16x16xf32>
    %64 = arith.negf %63 : vector<16x16xf32>
    %65 = math.exp %64 : vector<16x16xf32>
    %cst = arith.constant 1.000000e+00 : f32
    %66 = vector.broadcast %cst : f32 to vector<16x16xf32>
    %67 = arith.addf %66, %65 : vector<16x16xf32>
    %68 = arith.divf %66, %67 : vector<16x16xf32>
    %c3_39 = arith.constant 3 : index
    %c0_40 = arith.constant 0 : index
    %69 = memref.load %arg2[%c3_39, %c0_40] : memref<4x4xf32, #tpu.memory_space<smem>>
    %70 = vector.broadcast %69 : f32 to vector<16x16xf32>
    %71 = arith.mulf %1, %70 : vector<16x16xf32>
    %c3_41 = arith.constant 3 : index
    %c1_42 = arith.constant 1 : index
    %72 = memref.load %arg2[%c3_41, %c1_42] : memref<4x4xf32, #tpu.memory_space<smem>>
    %73 = vector.broadcast %72 : f32 to vector<16x16xf32>
    %74 = arith.mulf %3, %73 : vector<16x16xf32>
    %75 = arith.addf %71, %74 : vector<16x16xf32>
    %c3_43 = arith.constant 3 : index
    %c2_44 = arith.constant 2 : index
    %76 = memref.load %arg2[%c3_43, %c2_44] : memref<4x4xf32, #tpu.memory_space<smem>>
    %77 = vector.broadcast %76 : f32 to vector<16x16xf32>
    %78 = arith.mulf %5, %77 : vector<16x16xf32>
    %79 = arith.addf %75, %78 : vector<16x16xf32>
    %c3_45 = arith.constant 3 : index
    %c3_46 = arith.constant 3 : index
    %80 = memref.load %arg2[%c3_45, %c3_46] : memref<4x4xf32, #tpu.memory_space<smem>>
    %81 = vector.broadcast %80 : f32 to vector<16x16xf32>
    %82 = arith.mulf %7, %81 : vector<16x16xf32>
    %83 = arith.addf %79, %82 : vector<16x16xf32>
    %c3_47 = arith.constant 3 : index
    %84 = memref.load %arg3[%c3_47] : memref<4xf32, #tpu.memory_space<smem>>
    %85 = vector.broadcast %84 : f32 to vector<16x16xf32>
    %86 = arith.addf %83, %85 : vector<16x16xf32>
    %87 = arith.negf %86 : vector<16x16xf32>
    %88 = math.exp %87 : vector<16x16xf32>
    %cst_48 = arith.constant 1.000000e+00 : f32
    %89 = vector.broadcast %cst_48 : f32 to vector<16x16xf32>
    %90 = arith.addf %89, %88 : vector<16x16xf32>
    %91 = arith.divf %89, %90 : vector<16x16xf32>
    %92 = arith.mulf %26, %26 : vector<16x16xf32>
    %93 = arith.mulf %45, %45 : vector<16x16xf32>
    %94 = arith.addf %92, %93 : vector<16x16xf32>
    %95 = arith.mulf %68, %68 : vector<16x16xf32>
    %96 = arith.addf %94, %95 : vector<16x16xf32>
    %97 = math.sqrt %96 : vector<16x16xf32>
    %cst_49 = arith.constant 9.99999996E-13 : f32
    %98 = vector.broadcast %cst_49 : f32 to vector<16x16xf32>
    %99 = arith.maximumf %97, %98 : vector<16x16xf32>
    %100 = arith.mulf %91, %99 : vector<16x16xf32>
    %101 = tpu.concatenate %26, %45, %68, %100 in 0 : vector<16x16xf32>, vector<16x16xf32>, vector<16x16xf32>, vector<16x16xf32> -> vector<64x16xf32>
    %c0_50 = arith.constant 0 : index
    %c0_51 = arith.constant 0 : index
    %102 = vector.load %arg6[%c0_50, %c0_51] : memref<16x32xf32, #tpu.memory_space<vmem>>, vector<16x32xf32>
    %cst_52 = arith.constant dense<0.000000e+00> : vector<64x32xf32>
    %103 = tpu.matmul %101, %102, %cst_52 {dimension_numbers = #tpu.dot_dimension_numbers<[1], [0], [0], [1], [0, 0, 1, 1], [], []>} : vector<64x16xf32>, vector<16x32xf32>, vector<64x32xf32> -> vector<64x32xf32>
    %c0_53 = arith.constant 0 : index
    %c0_54 = arith.constant 0 : index
    %104 = vector.load %arg7[%c0_53, %c0_54] : memref<32x16xf32, #tpu.memory_space<vmem>>, vector<32x16xf32>
    %105 = vector.extract_strided_slice %103 {offsets = [0, 0], sizes = [16, 32], strides = [1, 1]} : vector<64x32xf32> to vector<16x32xf32>
    %cst_55 = arith.constant dense<0.000000e+00> : vector<32x32xf32>
    %106 = tpu.matmul %104, %105, %cst_55 {dimension_numbers = #tpu.dot_dimension_numbers<[1], [0], [0], [1], [0, 0, 1, 1], [], []>} : vector<32x16xf32>, vector<16x32xf32>, vector<32x32xf32> -> vector<32x32xf32>
    %107 = vector.extract_strided_slice %103 {offsets = [16, 0], sizes = [16, 32], strides = [1, 1]} : vector<64x32xf32> to vector<16x32xf32>
    %cst_56 = arith.constant dense<0.000000e+00> : vector<32x32xf32>
    %108 = tpu.matmul %104, %107, %cst_56 {dimension_numbers = #tpu.dot_dimension_numbers<[1], [0], [0], [1], [0, 0, 1, 1], [], []>} : vector<32x16xf32>, vector<16x32xf32>, vector<32x32xf32> -> vector<32x32xf32>
    %109 = vector.extract_strided_slice %103 {offsets = [32, 0], sizes = [16, 32], strides = [1, 1]} : vector<64x32xf32> to vector<16x32xf32>
    %cst_57 = arith.constant dense<0.000000e+00> : vector<32x32xf32>
    %110 = tpu.matmul %104, %109, %cst_57 {dimension_numbers = #tpu.dot_dimension_numbers<[1], [0], [0], [1], [0, 0, 1, 1], [], []>} : vector<32x16xf32>, vector<16x32xf32>, vector<32x32xf32> -> vector<32x32xf32>
    %111 = vector.extract_strided_slice %103 {offsets = [48, 0], sizes = [16, 32], strides = [1, 1]} : vector<64x32xf32> to vector<16x32xf32>
    %cst_58 = arith.constant dense<0.000000e+00> : vector<32x32xf32>
    %112 = tpu.matmul %104, %111, %cst_58 {dimension_numbers = #tpu.dot_dimension_numbers<[1], [0], [0], [1], [0, 0, 1, 1], [], []>} : vector<32x16xf32>, vector<16x32xf32>, vector<32x32xf32> -> vector<32x32xf32>
    %c0_59 = arith.constant 0 : index
    %c0_60 = arith.constant 0 : index
    %c0_61 = arith.constant 0 : index
    %113 = vector.load %arg4[%c0_59, %c0_60, %c0_61] : memref<1x1x32xf32, #tpu.memory_space<vmem>>, vector<1x1x32xf32>
    %114 = vector.shape_cast %113 : vector<1x1x32xf32> to vector<1x32xf32>
    %c0_62 = arith.constant 0 : index
    %c0_63 = arith.constant 0 : index
    %c0_64 = arith.constant 0 : index
    %115 = vector.load %arg5[%c0_62, %c0_63, %c0_64] : memref<1x32x1xf32, #tpu.memory_space<vmem>>, vector<1x32x1xf32>
    %116 = vector.shape_cast %115 : vector<1x32x1xf32> to vector<32x1xf32>
    %117 = arith.mulf %114, %114 : vector<1x32xf32>
    %118 = arith.mulf %116, %116 : vector<32x1xf32>
    %119 = vector.broadcast %117 : vector<1x32xf32> to vector<32x32xf32>
    %120 = vector.broadcast %118 : vector<32x1xf32> to vector<32x32xf32>
    %121 = arith.addf %119, %120 : vector<32x32xf32>
    %cst_65 = arith.constant 1.000000e+00 : f32
    %122 = vector.broadcast %cst_65 : f32 to vector<32x32xf32>
    %123 = arith.addf %121, %122 : vector<32x32xf32>
    %124 = math.sqrt %123 : vector<32x32xf32>
    %125 = vector.broadcast %114 : vector<1x32xf32> to vector<32x32xf32>
    %126 = arith.mulf %106, %125 : vector<32x32xf32>
    %127 = vector.broadcast %116 : vector<32x1xf32> to vector<32x32xf32>
    %128 = arith.mulf %108, %127 : vector<32x32xf32>
    %129 = arith.addf %126, %128 : vector<32x32xf32>
    %130 = arith.addf %129, %110 : vector<32x32xf32>
    %131 = arith.mulf %112, %124 : vector<32x32xf32>
    %132 = tpu.reciprocal %130 {approx = true} : vector<32x32xf32> -> vector<32x32xf32>
    %133 = arith.mulf %130, %132 : vector<32x32xf32>
    %cst_66 = arith.constant 2.000000e+00 : f32
    %134 = vector.broadcast %cst_66 : f32 to vector<32x32xf32>
    %135 = arith.subf %134, %133 : vector<32x32xf32>
    %136 = arith.mulf %132, %135 : vector<32x32xf32>
    %137 = arith.mulf %131, %136 : vector<32x32xf32>
    %c0_67 = arith.constant 0 : index
    %c0_68 = arith.constant 0 : index
    %c0_69 = arith.constant 0 : index
    %138 = vector.load %arg10[%c0_67, %c0_68, %c0_69] : memref<1x32x32xf32, #tpu.memory_space<vmem>>, vector<1x32x32xf32>
    %139 = vector.shape_cast %138 : vector<1x32x32xf32> to vector<32x32xf32>
    %140 = vector.shape_cast %137 : vector<32x32xf32> to vector<1x32x32xf32>
    tpu.vector_store %arg10[%c0_67, %c0_68, %c0_69], %140 {strides = array<i32>} : memref<1x32x32xf32, #tpu.memory_space<vmem>>, vector<1x32x32xf32>,
    %c0_70 = arith.constant 0 : index
    %c0_71 = arith.constant 0 : index
    %141 = vector.load %arg8[%c0_70, %c0_71] : memref<16x32xf32, #tpu.memory_space<vmem>>, vector<16x32xf32>
    %cst_72 = arith.constant dense<0.000000e+00> : vector<16x32xf32>
    %142 = tpu.matmul %141, %137, %cst_72 {dimension_numbers = #tpu.dot_dimension_numbers<[1], [0], [0], [1], [0, 0, 1, 1], [], []>} : vector<16x32xf32>, vector<32x32xf32>, vector<16x32xf32> -> vector<16x32xf32>
    %c0_73 = arith.constant 0 : index
    %c0_74 = arith.constant 0 : index
    %143 = vector.load %arg9[%c0_73, %c0_74] : memref<32x16xf32, #tpu.memory_space<vmem>>, vector<32x16xf32>
    %cst_75 = arith.constant dense<0.000000e+00> : vector<16x16xf32>
    %144 = tpu.matmul %142, %143, %cst_75 {dimension_numbers = #tpu.dot_dimension_numbers<[1], [0], [0], [1], [0, 0, 1, 1], [], []>} : vector<16x32xf32>, vector<32x16xf32>, vector<16x16xf32> -> vector<16x16xf32>
    %c0_76 = arith.constant 0 : index
    %c0_77 = arith.constant 0 : index
    %c0_78 = arith.constant 0 : index
    %145 = vector.load %arg11[%c0_76, %c0_77, %c0_78] : memref<1x16x16xf32, #tpu.memory_space<vmem>>, vector<1x16x16xf32>
    %146 = vector.shape_cast %145 : vector<1x16x16xf32> to vector<16x16xf32>
    %147 = vector.shape_cast %144 : vector<16x16xf32> to vector<1x16x16xf32>
    tpu.vector_store %arg11[%c0_76, %c0_77, %c0_78], %147 {strides = array<i32>} : memref<1x16x16xf32, #tpu.memory_space<vmem>>, vector<1x16x16xf32>,
    return
  }
  func.func @transform_0(%arg0: i32) -> (i32, i32, i32, i32) {
    %c0_i32 = arith.constant 0 : i32
    %c0_i32_0 = arith.constant 0 : i32
    %c0_i32_1 = arith.constant 0 : i32
    %c0_i32_2 = arith.constant 0 : i32
    return %arg0, %c0_i32, %c0_i32_0, %c0_i32_1 : i32, i32, i32, i32
  }
  func.func @transform_1(%arg0: i32) -> (i32, i32) {
    %c0_i32 = arith.constant 0 : i32
    %c0_i32_0 = arith.constant 0 : i32
    %c0_i32_1 = arith.constant 0 : i32
    return %c0_i32, %c0_i32_0 : i32, i32
  }
  func.func @transform_2(%arg0: i32) -> i32 {
    %c0_i32 = arith.constant 0 : i32
    %c0_i32_0 = arith.constant 0 : i32
    return %c0_i32 : i32
  }
  func.func @transform_3(%arg0: i32) -> (i32, i32, i32) {
    %c0_i32 = arith.constant 0 : i32
    %c0_i32_0 = arith.constant 0 : i32
    %c0_i32_1 = arith.constant 0 : i32
    return %arg0, %c0_i32, %c0_i32_0 : i32, i32, i32
  }
  func.func @transform_4(%arg0: i32) -> (i32, i32, i32) {
    %c0_i32 = arith.constant 0 : i32
    %c0_i32_0 = arith.constant 0 : i32
    %c0_i32_1 = arith.constant 0 : i32
    return %arg0, %c0_i32, %c0_i32_0 : i32, i32, i32
  }
  func.func @transform_5(%arg0: i32) -> (i32, i32) {
    %c0_i32 = arith.constant 0 : i32
    %c0_i32_0 = arith.constant 0 : i32
    %c0_i32_1 = arith.constant 0 : i32
    return %c0_i32, %c0_i32_0 : i32, i32
  }
  func.func @transform_6(%arg0: i32) -> (i32, i32) {
    %c0_i32 = arith.constant 0 : i32
    %c0_i32_0 = arith.constant 0 : i32
    %c0_i32_1 = arith.constant 0 : i32
    return %c0_i32, %c0_i32_0 : i32, i32
  }
  func.func @transform_7(%arg0: i32) -> (i32, i32) {
    %c0_i32 = arith.constant 0 : i32
    %c0_i32_0 = arith.constant 0 : i32
    %c0_i32_1 = arith.constant 0 : i32
    return %c0_i32, %c0_i32_0 : i32, i32
  }
  func.func @transform_8(%arg0: i32) -> (i32, i32) {
    %c0_i32 = arith.constant 0 : i32
    %c0_i32_0 = arith.constant 0 : i32
    %c0_i32_1 = arith.constant 0 : i32
    return %c0_i32, %c0_i32_0 : i32, i32
  }
  func.func @transform_9(%arg0: i32) -> (i32, i32, i32) {
    %c0_i32 = arith.constant 0 : i32
    %c0_i32_0 = arith.constant 0 : i32
    %c0_i32_1 = arith.constant 0 : i32
    return %arg0, %c0_i32, %c0_i32_0 : i32, i32, i32
  }
  func.func @transform_10(%arg0: i32) -> (i32, i32, i32) {
    %c0_i32 = arith.constant 0 : i32
    %c0_i32_0 = arith.constant 0 : i32
    %c0_i32_1 = arith.constant 0 : i32
    return %arg0, %c0_i32, %c0_i32_0 : i32, i32, i32
  }
}

</mosaic_0001>

<llo_original>
// kernel: plane_depth_forward.1
$region0: #{plane_depth_forward.1}
  #allocation0 [shape = 'u32[]', space=smem, size = 0x4, offset = 0x4, fixed_abs, tag = 'smem constant byte address 0x4 - core index']
  #allocation1 [shape = 'u32[72,128]{1,0:T(1,128)}', space=vmem, size = 0x9000, scoped, tag = 'internal scratch']
  %s0 = inlined_call_operand.hbm [shape: f32[2,4,16,16], index: 0, kind: input, shape index: {}]
  %s1 = inlined_call_operand.vmem [shape: f32[4,4], index: 1, kind: input, shape index: {}]
  %s2 = inlined_call_operand.vmem [shape: f32[4], index: 2, kind: input, shape index: {}]
  %s3 = inlined_call_operand.vmem [shape: f32[2,1,32], index: 3, kind: input, shape index: {}]
  %s4 = inlined_call_operand.vmem [shape: f32[2,32,1], index: 4, kind: input, shape index: {}]
  %s5 = inlined_call_operand.hbm [shape: f32[16,32], index: 5, kind: input, shape index: {}]
  %s6 = inlined_call_operand.vmem [shape: f32[32,16], index: 6, kind: input, shape index: {}]
  %s7 = inlined_call_operand.hbm [shape: f32[16,32], index: 7, kind: input, shape index: {}]
  %s8 = inlined_call_operand.vmem [shape: f32[32,16], index: 8, kind: input, shape index: {}]
  %s9 = inlined_call_operand.hbm [shape: f32[2,32,32], index: 9, kind: output, shape index: {0}]
  %s10 = inlined_call_operand.hbm [shape: f32[2,16,16], index: 10, kind: output, shape index: {1}]
  %11 = xla_tuple %s9, %s10
  %s12 = sld [smem:[#allocation0]]
  $region97: #{plane_depth_forward.1} parent=0
    _
  %s14 = ssub.s32 1, %s12
  %s15 = scalar_select 0, %s14, %s12
  $region1: #{plane_depth_forward.1} parent=0
    #allocation2 [shape = 'u8[65536]{0}', space=vmem, size = 0x10000, scoped, tag = 'input window, operand 0']
    #allocation3 [shape = 's32[2]{0}', space=sflag, size = 0x8, scoped, tag = 'scoped memory for plane_depth_forward.1']
    #allocation4 [shape = 's32[2]{0}', space=sflag, size = 0x8, scoped, tag = 'scoped memory for plane_depth_forward.1']
    #allocation5 [shape = 's32[2]{0}', space=sflag, size = 0x8, scoped, tag = 'scoped memory for plane_depth_forward.1']
    #allocation6 [shape = 'u8[2048]{0}', space=smem, size = 0x800, scoped, tag = 'input window, operand 1, single buffered']
    #allocation7 [shape = 'u8[512]{0}', space=smem, size = 0x200, scoped, tag = 'input window, operand 2, single buffered']
    #allocation8 [shape = 's32[1]{0}', space=sflag, size = 0x4, scoped, tag = 'scoped memory for plane_depth_forward.1']
    #allocation9 [shape = 'u8[8192]{0}', space=vmem, size = 0x2000, scoped, tag = 'input window, operand 5, single buffered']
    #allocation10 [shape = 's32[1]{0}', space=sflag, size = 0x4, scoped, tag = 'scoped memory for plane_depth_forward.1']
    #allocation11 [shape = 'u8[8192]{0}', space=vmem, size = 0x2000, scoped, tag = 'input window, operand 7, single buffered']
    #allocation12 [shape = 'u8[32768]{0}', space=vmem, size = 0x8000, scoped, tag = 'output window, operand 0']
    #allocation13 [shape = 'u8[16384]{0}', space=vmem, size = 0x4000, scoped, tag = 'output window, operand 1']
    #allocation14 [shape = 's32[2]{0}', space=sflag, size = 0x8, scoped, tag = 'scoped memory for plane_depth_forward.1']
    %16 = vsyncpa [#allocation3], 0
    %s17 = scalar_lea.sflag [#allocation3], 1
    %18 = vsyncpa %s17, 0
    %19 = vsyncpa [#allocation5], 0
    %20 = vsyncpa [#allocation8], 0
    %21 = vsyncpa [#allocation10], 0
    %22 = vsyncpa [#allocation4], 0
    %s23 = scalar_lea.sflag [#allocation4], 1
    %24 = vsyncpa %s23, 0
    %25 = vsyncpa [#allocation14], 0
    %s26 = scalar_lea.sflag [#allocation14], 1
    %27 = vsyncpa %s26, 0
    loop: start=0, step=1, limit=4
    $region2: #{plane_depth_forward.1} parent=1 // loop_pre_header
      _
    $region3: #{plane_depth_forward.1} parent=1 // loop_header
      %s29 = sphi 0, %s33
      %p30 = scmp.ge.s32.totalorder %s29, 4
      %s39 = sphi 0, %s41
      %s42 = sphi 0, %s39
      %s43 = sphi 0, %s42
      %s59 = sphi 0, %s43
      %s63 = sphi 0, %s63
      %s65 = sphi 0, %s63
      %s66 = sphi 0, %s65
      %s80 = sphi 0, %s66
      %s84 = sphi 0, %s84
      %s86 = sphi 0, %s84
      %s87 = sphi 0, %s86
      %s101 = sphi 0, %s87
      %s107 = sphi 0, %s109
      %s110 = sphi 0, %s107
      %s111 = sphi 0, %s110
      %s127 = sphi 0, %s111
      %s133 = sphi 0, %s135
      %s136 = sphi 0, %s133
      %s137 = sphi 0, %s136
      %s153 = sphi 0, %s137
      %s157 = sphi 0, %s157
      %s159 = sphi 0, %s157
      %s160 = sphi 0, %s159
      %s174 = sphi 0, %s160
      %s178 = sphi 0, %s178
      %s180 = sphi 0, %s178
      %s181 = sphi 0, %s180
      %s195 = sphi 0, %s181
      %s199 = sphi 0, %s199
      %s201 = sphi 0, %s199
      %s202 = sphi 0, %s201
      %s216 = sphi 0, %s202
      %s220 = sphi 0, %s220
      %s222 = sphi 0, %s220
      %s223 = sphi 0, %s222
      %s237 = sphi 0, %s223
      %s243 = sphi 0, %s245
      %s246 = sphi 0, %s243
      %s247 = sphi 0, %s246
      %s263 = sphi 0, %s247
      %s269 = sphi 0, %s271
      %s272 = sphi 0, %s269
      %s273 = sphi 0, %s272
      %s289 = sphi 0, %s273
    $region4: #{plane_depth_forward.1} parent=1 // loop_header_branch
      %32 = sbr.rel (%p30) target = $region8
    $region5: #{plane_depth_forward.1} parent=1 // loop_body
      %s34 = ssub.s32 %s29, 1
      %s35 = ssub.s32 %s29, 2
      %s36 = sadd.s32 %s29, 1
      %s37 = ssub.s32 %s29, %s36
      %p38 = scmp.eq.s32.totalorder %s37, 0
      %s40 = sadd.s32 %s39, 1
      %s41 = scalar_select %p38, %s39, %s40
      %p44 = pneg %p38
      %p45 = scmp.eq.s32.totalorder %s29, 1
      %p46 = por %p44, %p45
      %p47 = scmp.ne.s32.totalorder %s39, %s42
      %p48 = scmp.eq.s32.totalorder %s29, 0
      %p49 = por %p47, %p48
      %p50 = scmp.ne.s32.totalorder %s39, %s42
      %p51 = scmp.eq.s32.totalorder %s34, 1
      %p52 = por %p50, %p51
      %p53 = scmp.ne.s32.totalorder %s42, %s43
      %p54 = scmp.eq.s32.totalorder %s34, 0
      %p55 = por %p53, %p54
      %p56 = scmp.ne.s32.totalorder %s42, %s43
      %p57 = scmp.eq.s32.totalorder %s35, 1
      %p58 = por %p56, %p57
      %p60 = scmp.ne.s32.totalorder %s43, %s59
      %p61 = scmp.eq.s32.totalorder %s35, 0
      %p62 = por %p60, %p61
      %s64 = sadd.s32 %s63, 1
      %p67 = scmp.eq.s32.totalorder %s29, 1
      %p68 = scmp.ne.s32.totalorder %s63, %s65
      %p69 = scmp.eq.s32.totalorder %s29, 0
      %p70 = por %p68, %p69
      %p71 = scmp.ne.s32.totalorder %s63, %s65
      %p72 = scmp.eq.s32.totalorder %s34, 1
      %p73 = por %p71, %p72
      %p74 = scmp.ne.s32.totalorder %s65, %s66
      %p75 = scmp.eq.s32.totalorder %s34, 0
      %p76 = por %p74, %p75
      %p77 = scmp.ne.s32.totalorder %s65, %s66
      %p78 = scmp.eq.s32.totalorder %s35, 1
      %p79 = por %p77, %p78
      %p81 = scmp.ne.s32.totalorder %s66, %s80
      %p82 = scmp.eq.s32.totalorder %s35, 0
      %p83 = por %p81, %p82
      %s85 = sadd.s32 %s84, 1
      %p88 = scmp.eq.s32.totalorder %s29, 1
      %p89 = scmp.ne.s32.totalorder %s84, %s86
      %p90 = scmp.eq.s32.totalorder %s29, 0
      %p91 = por %p89, %p90
      %p92 = scmp.ne.s32.totalorder %s84, %s86
      %p93 = scmp.eq.s32.totalorder %s34, 1
      %p94 = por %p92, %p93
      %p95 = scmp.ne.s32.totalorder %s86, %s87
      %p96 = scmp.eq.s32.totalorder %s34, 0
      %p97 = por %p95, %p96
      %p98 = scmp.ne.s32.totalorder %s86, %s87
      %p99 = scmp.eq.s32.totalorder %s35, 1
      %p100 = por %p98, %p99
      %p102 = scmp.ne.s32.totalorder %s87, %s101
      %p103 = scmp.eq.s32.totalorder %s35, 0
      %p104 = por %p102, %p103
      %s105 = ssub.s32 %s29, %s36
      %p106 = scmp.eq.s32.totalorder %s105, 0
      %s108 = sadd.s32 %s107, 1
      %s109 = scalar_select %p106, %s107, %s108
      %p112 = pneg %p106
      %p113 = scmp.eq.s32.totalorder %s29, 1
      %p114 = por %p112, %p113
      %p115 = scmp.ne.s32.totalorder %s107, %s110
      %p116 = scmp.eq.s32.totalorder %s29, 0
      %p117 = por %p115, %p116
      %p118 = scmp.ne.s32.totalorder %s107, %s110
      %p119 = scmp.eq.s32.totalorder %s34, 1
      %p120 = por %p118, %p119
      %p121 = scmp.ne.s32.totalorder %s110, %s111
      %p122 = scmp.eq.s32.totalorder %s34, 0
      %p123 = por %p121, %p122
      %p124 = scmp.ne.s32.totalorder %s110, %s111
      %p125 = scmp.eq.s32.totalorder %s35, 1
      %p126 = por %p124, %p125
      %p128 = scmp.ne.s32.totalorder %s111, %s127
      %p129 = scmp.eq.s32.totalorder %s35, 0
      %p130 = por %p128, %p129
      %s131 = ssub.s32 %s29, %s36
      %p132 = scmp.eq.s32.totalorder %s131, 0
      %s134 = sadd.s32 %s133, 1
      %s135 = scalar_select %p132, %s133, %s134
      %p138 = pneg %p132
      %p139 = scmp.eq.s32.totalorder %s29, 1
      %p140 = por %p138, %p139
      %p141 = scmp.ne.s32.totalorder %s133, %s136
      %p142 = scmp.eq.s32.totalorder %s29, 0
      %p143 = por %p141, %p142
      %p144 = scmp.ne.s32.totalorder %s133, %s136
      %p145 = scmp.eq.s32.totalorder %s34, 1
      %p146 = por %p144, %p145
      %p147 = scmp.ne.s32.totalorder %s136, %s137
      %p148 = scmp.eq.s32.totalorder %s34, 0
      %p149 = por %p147, %p148
      %p150 = scmp.ne.s32.totalorder %s136, %s137
      %p151 = scmp.eq.s32.totalorder %s35, 1
      %p152 = por %p150, %p151
      %p154 = scmp.ne.s32.totalorder %s137, %s153
      %p155 = scmp.eq.s32.totalorder %s35, 0
      %p156 = por %p154, %p155
      %s158 = sadd.s32 %s157, 1
      %p161 = scmp.eq.s32.totalorder %s29, 1
      %p162 = scmp.ne.s32.totalorder %s157, %s159
      %p163 = scmp.eq.s32.totalorder %s29, 0
      %p164 = por %p162, %p163
      %p165 = scmp.ne.s32.totalorder %s157, %s159
      %p166 = scmp.eq.s32.totalorder %s34, 1
      %p167 = por %p165, %p166
      %p168 = scmp.ne.s32.totalorder %s159, %s160
      %p169 = scmp.eq.s32.totalorder %s34, 0
      %p170 = por %p168, %p169
      %p171 = scmp.ne.s32.totalorder %s159, %s160
      %p172 = scmp.eq.s32.totalorder %s35, 1
      %p173 = por %p171, %p172
      %p175 = scmp.ne.s32.totalorder %s160, %s174
      %p176 = scmp.eq.s32.totalorder %s35, 0
      %p177 = por %p175, %p176
      %s179 = sadd.s32 %s178, 1
      %p182 = scmp.eq.s32.totalorder %s29, 1
      %p183 = scmp.ne.s32.totalorder %s178, %s180
      %p184 = scmp.eq.s32.totalorder %s29, 0
      %p185 = por %p183, %p184
      %p186 = scmp.ne.s32.totalorder %s178, %s180
      %p187 = scmp.eq.s32.totalorder %s34, 1
      %p188 = por %p186, %p187
      %p189 = scmp.ne.s32.totalorder %s180, %s181
      %p190 = scmp.eq.s32.totalorder %s34, 0
      %p191 = por %p189, %p190
      %p192 = scmp.ne.s32.totalorder %s180, %s181
      %p193 = scmp.eq.s32.totalorder %s35, 1
      %p194 = por %p192, %p193
      %p196 = scmp.ne.s32.totalorder %s181, %s195
      %p197 = scmp.eq.s32.totalorder %s35, 0
      %p198 = por %p196, %p197
      %s200 = sadd.s32 %s199, 1
      %p203 = scmp.eq.s32.totalorder %s29, 1
      %p204 = scmp.ne.s32.totalorder %s199, %s201
      %p205 = scmp.eq.s32.totalorder %s29, 0
      %p206 = por %p204, %p205
      %p207 = scmp.ne.s32.totalorder %s199, %s201
      %p208 = scmp.eq.s32.totalorder %s34, 1
      %p209 = por %p207, %p208
      %p210 = scmp.ne.s32.totalorder %s201, %s202
      %p211 = scmp.eq.s32.totalorder %s34, 0
      %p212 = por %p210, %p211
      %p213 = scmp.ne.s32.totalorder %s201, %s202
      %p214 = scmp.eq.s32.totalorder %s35, 1
      %p215 = por %p213, %p214
      %p217 = scmp.ne.s32.totalorder %s202, %s216
      %p218 = scmp.eq.s32.totalorder %s35, 0
      %p219 = por %p217, %p218
      %s221 = sadd.s32 %s220, 1
      %p224 = scmp.eq.s32.totalorder %s29, 1
      %p225 = scmp.ne.s32.totalorder %s220, %s222
      %p226 = scmp.eq.s32.totalorder %s29, 0
      %p227 = por %p225, %p226
      %p228 = scmp.ne.s32.totalorder %s220, %s222
      %p229 = scmp.eq.s32.totalorder %s34, 1
      %p230 = por %p228, %p229
      %p231 = scmp.ne.s32.totalorder %s222, %s223
      %p232 = scmp.eq.s32.totalorder %s34, 0
      %p233 = por %p231, %p232
      %p234 = scmp.ne.s32.totalorder %s222, %s223
      %p235 = scmp.eq.s32.totalorder %s35, 1
      %p236 = por %p234, %p235
      %p238 = scmp.ne.s32.totalorder %s223, %s237
      %p239 = scmp.eq.s32.totalorder %s35, 0
      %p240 = por %p238, %p239
      %s241 = ssub.s32 %s29, %s36
      %p242 = scmp.eq.s32.totalorder %s241, 0
      %s244 = sadd.s32 %s243, 1
      %s245 = scalar_select %p242, %s243, %s244
      %p248 = pneg %p242
      %p249 = scmp.eq.s32.totalorder %s29, 1
      %p250 = por %p248, %p249
      %p251 = scmp.ne.s32.totalorder %s243, %s246
      %p252 = scmp.eq.s32.totalorder %s29, 0
      %p253 = por %p251, %p252
      %p254 = scmp.ne.s32.totalorder %s243, %s246
      %p255 = scmp.eq.s32.totalorder %s34, 1
      %p256 = por %p254, %p255
      %p257 = scmp.ne.s32.totalorder %s246, %s247
      %p258 = scmp.eq.s32.totalorder %s34, 0
      %p259 = por %p257, %p258
      %p260 = scmp.ne.s32.totalorder %s246, %s247
      %p261 = scmp.eq.s32.totalorder %s35, 1
      %p262 = por %p260, %p261
      %p264 = scmp.ne.s32.totalorder %s247, %s263
      %p265 = scmp.eq.s32.totalorder %s35, 0
      %p266 = por %p264, %p265
      %s267 = ssub.s32 %s29, %s36
      %p268 = scmp.eq.s32.totalorder %s267, 0
      %s270 = sadd.s32 %s269, 1
      %s271 = scalar_select %p268, %s269, %s270
      %p274 = pneg %p268
      %p275 = scmp.eq.s32.totalorder %s29, 1
      %p276 = por %p274, %p275
      %p277 = scmp.ne.s32.totalorder %s269, %s272
      %p278 = scmp.eq.s32.totalorder %s29, 0
      %p279 = por %p277, %p278
      %p280 = scmp.ne.s32.totalorder %s269, %s272
      %p281 = scmp.eq.s32.totalorder %s34, 1
      %p282 = por %p280, %p281
      %p283 = scmp.ne.s32.totalorder %s272, %s273
      %p284 = scmp.eq.s32.totalorder %s34, 0
      %p285 = por %p283, %p284
      %p286 = scmp.ne.s32.totalorder %s272, %s273
      %p287 = scmp.eq.s32.totalorder %s35, 1
      %p288 = por %p286, %p287
      %p290 = scmp.ne.s32.totalorder %s273, %s289
      %p291 = scmp.eq.s32.totalorder %s35, 0
      %p292 = por %p290, %p291
      %p293 = scmp.le.s32.totalorder 1, %s29
      %p294 = scmp.lt.s32.totalorder %s29, 3
      %p295 = pnand %p293, %p294
      %p296 = pneg %p295
      // Predicated region
      $region9: #{plane_depth_forward.1} parent=5 // pred_check
        _
      $region10: #{plane_depth_forward.1} parent=5 // pred_check_branch
        %298 = sbr.rel (%p295) target = $region12
      $region11: #{plane_depth_forward.1} parent=5 // pred_region
        %s299 = ssub.s32 %s29, 1
        // Predicated region
        $region13: #{plane_depth_forward.1} parent=11 // pred_check
          %p300 = pneg %p76
        $region14: #{plane_depth_forward.1} parent=11 // pred_check_branch
          %302 = sbr.rel (%p300) target = $region16
        $region15: #{plane_depth_forward.1} parent=11 // pred_region
          %304 = vsyncadd [#allocation5], 0
          %s306 = sshll.u32 %s1, 4
          %s307 = int_to_ptr.vmem [resolvable:$true] %s306
          %309 = dma.vmem_to_smem %s307, 64, [#allocation6], [#allocation5]
        $region16: #{plane_depth_forward.1} parent=11 // pred_fallthru
          _
        // Predicated region
        $region17: #{plane_depth_forward.1} parent=11 // pred_check
          %p310 = pneg %p97
        $region18: #{plane_depth_forward.1} parent=11 // pred_check_branch
          %312 = sbr.rel (%p310) target = $region20
        $region19: #{plane_depth_forward.1} parent=11 // pred_region
          %314 = vsyncadd [#allocation8], 0
          %s316 = sshll.u32 %s2, 4
          %s317 = int_to_ptr.vmem [resolvable:$true] %s316
          %319 = dma.vmem_to_smem %s317, 16, [#allocation7], [#allocation8]
        $region20: #{plane_depth_forward.1} parent=11 // pred_fallthru
          _
        // Predicated region
        $region21: #{plane_depth_forward.1} parent=11 // pred_check
          %p320 = pneg %p170
        $region22: #{plane_depth_forward.1} parent=11 // pred_check_branch
          %322 = sbr.rel (%p320) target = $region24
        $region23: #{plane_depth_forward.1} parent=11 // pred_region
          %324 = vsyncadd [#allocation10], 0
          %s325 = sshll.u32 %s5, 4
          %s326 = int_to_ptr.hbm [resolvable:$true] %s325
          %s327 = sshll.u32 [#allocation9], 4
          %s328 = int_to_ptr.vmem [resolvable:$true] %s327
          %333 = dma.hbm_to_vmem [thread:$0]  %s326, 256, %s328, [#allocation10], 128, 128, 8
        $region24: #{plane_depth_forward.1} parent=11 // pred_fallthru
          _
        // Predicated region
        $region25: #{plane_depth_forward.1} parent=11 // pred_check
          %p334 = pneg %p191
        $region26: #{plane_depth_forward.1} parent=11 // pred_check_branch
          %336 = sbr.rel (%p334) target = $region28
        $region27: #{plane_depth_forward.1} parent=11 // pred_region
          _
        $region28: #{plane_depth_forward.1} parent=11 // pred_fallthru
          _
        // Predicated region
        $region29: #{plane_depth_forward.1} parent=11 // pred_check
          %p337 = pneg %p212
        $region30: #{plane_depth_forward.1} parent=11 // pred_check_branch
          %339 = sbr.rel (%p337) target = $region32
        $region31: #{plane_depth_forward.1} parent=11 // pred_region
          %341 = vsyncadd [#allocation10], 0
          %s342 = sshll.u32 %s7, 4
          %s343 = int_to_ptr.hbm [resolvable:$true] %s342
          %s344 = sshll.u32 [#allocation11], 4
          %s345 = int_to_ptr.vmem [resolvable:$true] %s344
          %350 = dma.hbm_to_vmem [thread:$0]  %s343, 256, %s345, [#allocation10], 128, 128, 8
        $region32: #{plane_depth_forward.1} parent=11 // pred_fallthru
          _
        // Predicated region
        $region33: #{plane_depth_forward.1} parent=11 // pred_check
          %p351 = pneg %p233
        $region34: #{plane_depth_forward.1} parent=11 // pred_check_branch
          %353 = sbr.rel (%p351) target = $region36
        $region35: #{plane_depth_forward.1} parent=11 // pred_region
          _
        $region36: #{plane_depth_forward.1} parent=11 // pred_fallthru
          _
      $region12: #{plane_depth_forward.1} parent=5 // pred_fallthru
        _
      %p354 = scmp.lt.s32.totalorder %s29, 2
      // Predicated region
      $region37: #{plane_depth_forward.1} parent=5 // pred_check
        %p355 = pneg %p354
      $region38: #{plane_depth_forward.1} parent=5 // pred_check_branch
        %357 = sbr.rel (%p355) target = $region40
      $region39: #{plane_depth_forward.1} parent=5 // pred_region
        // Predicated region
        $region41: #{plane_depth_forward.1} parent=39 // pred_check
          %p358 = pneg %p49
        $region42: #{plane_depth_forward.1} parent=39 // pred_check_branch
          %360 = sbr.rel (%p358) target = $region44
        $region43: #{plane_depth_forward.1} parent=39 // pred_region
          %s361 = sand.u32 %s39, 1
          %s362 = scalar_lea.sflag [#allocation3], %s361
          %s363 = sand.u32 %s39, 1
          %s364 = smul.addr %s363, 64
          %s365 = scalar_lea.vmem [#allocation2], %s364
          %367 = vsyncadd %s362, 0
          %s368 = smul.addr %s29, 8
          %s369 = smul.addr %s368, 8
          %s370 = scalar_lea.hbm %s0, %s369
          %s371 = sshll.u32 %s370, 4
          %s372 = int_to_ptr.hbm [resolvable:$true] %s371
          %s373 = sshll.u32 %s365, 4
          %s374 = int_to_ptr.vmem [resolvable:$true] %s373
          %379 = dma.hbm_to_vmem [thread:$0]  %s372, 1024, %s374, %s362, 128, 128, 8
        $region44: #{plane_depth_forward.1} parent=39 // pred_fallthru
          _
        // Predicated region
        $region45: #{plane_depth_forward.1} parent=39 // pred_check
          %p380 = pneg %p117
        $region46: #{plane_depth_forward.1} parent=39 // pred_check_branch
          %382 = sbr.rel (%p380) target = $region48
        $region47: #{plane_depth_forward.1} parent=39 // pred_region
          %p383 = scmp.lt.s32.totalorder %s29, 1
          %s384 = scalar_select %p383, %s29, 1
          %s385 = scalar_lea.vmem %s3, %s384
        $region48: #{plane_depth_forward.1} parent=39 // pred_fallthru
          _
        // Predicated region
        $region49: #{plane_depth_forward.1} parent=39 // pred_check
          %p386 = pneg %p143
        $region50: #{plane_depth_forward.1} parent=39 // pred_check_branch
          %388 = sbr.rel (%p386) target = $region52
        $region51: #{plane_depth_forward.1} parent=39 // pred_region
          %p389 = scmp.lt.s32.totalorder %s29, 1
          %s390 = scalar_select %p389, %s29, 1
          %s391 = smul.addr %s390, 4
          %s392 = smul.addr %s391, 8
          %s393 = scalar_lea.vmem %s4, %s392
        $region52: #{plane_depth_forward.1} parent=39 // pred_fallthru
          _
      $region40: #{plane_depth_forward.1} parent=5 // pred_fallthru
        _
      %p394 = scmp.le.s32.totalorder 1, %s29
      %p395 = scmp.lt.s32.totalorder %s29, 3
      %p396 = pnand %p394, %p395
      %p397 = pneg %p396
      // Predicated region
      $region53: #{plane_depth_forward.1} parent=5 // pred_check
        _
      $region54: #{plane_depth_forward.1} parent=5 // pred_check_branch
        %399 = sbr.rel (%p396) target = $region56
      $region55: #{plane_depth_forward.1} parent=5 // pred_region
        %s400 = ssub.s32 %s29, 1
        %s401 = sand.u32 %s42, 1
        %s402 = scalar_lea.sflag [#allocation3], %s401
        %s403 = sand.u32 %s42, 1
        %s404 = smul.addr %s403, 64
        %s405 = scalar_lea.vmem [#allocation2], %s404
        // Predicated region
        $region57: #{plane_depth_forward.1} parent=55 // pred_check
          %p406 = pneg %p55
        $region58: #{plane_depth_forward.1} parent=55 // pred_check_branch
          %408 = sbr.rel (%p406) target = $region60
        $region59: #{plane_depth_forward.1} parent=55 // pred_region
          %410 = dma.done %s402, 1024
        $region60: #{plane_depth_forward.1} parent=55 // pred_fallthru
          _
        // Predicated region
        $region61: #{plane_depth_forward.1} parent=55 // pred_check
          %p411 = pneg %p76
        $region62: #{plane_depth_forward.1} parent=55 // pred_check_branch
          %413 = sbr.rel (%p411) target = $region64
        $region63: #{plane_depth_forward.1} parent=55 // pred_region
          %415 = dma.done [#allocation5], 64
        $region64: #{plane_depth_forward.1} parent=55 // pred_fallthru
          _
        // Predicated region
        $region65: #{plane_depth_forward.1} parent=55 // pred_check
          %p416 = pneg %p97
        $region66: #{plane_depth_forward.1} parent=55 // pred_check_branch
          %418 = sbr.rel (%p416) target = $region68
        $region67: #{plane_depth_forward.1} parent=55 // pred_region
          %420 = dma.done [#allocation8], 16
        $region68: #{plane_depth_forward.1} parent=55 // pred_fallthru
          _
        // Predicated region
        $region69: #{plane_depth_forward.1} parent=55 // pred_check
          %p421 = pneg %p170
        $region70: #{plane_depth_forward.1} parent=55 // pred_check_branch
          %423 = sbr.rel (%p421) target = $region72
        $region71: #{plane_depth_forward.1} parent=55 // pred_region
          %425 = dma.done [#allocation10], 256
        $region72: #{plane_depth_forward.1} parent=55 // pred_fallthru
          _
        // Predicated region
        $region73: #{plane_depth_forward.1} parent=55 // pred_check
          %p426 = pneg %p212
        $region74: #{plane_depth_forward.1} parent=55 // pred_check_branch
          %428 = sbr.rel (%p426) target = $region76
        $region75: #{plane_depth_forward.1} parent=55 // pred_region
          %430 = dma.done [#allocation10], 256
        $region76: #{plane_depth_forward.1} parent=55 // pred_fallthru
          _
        %431 = sfence
        %s432 = sand.u32 %s42, 1
        %s433 = scalar_lea.sflag [#allocation3], %s432
        %s434 = sand.u32 %s42, 1
        %s435 = smul.addr %s434, 64
        %s436 = scalar_lea.vmem [#allocation2], %s435
        %p437 = pneg %p55
        %p438 = pneg %p52
        %p439 = pneg %p76
        %p440 = pneg %p73
        %p441 = pneg %p97
        %p442 = pneg %p94
        %p443 = scmp.lt.s32.totalorder %s34, 1
        %s444 = scalar_select %p443, %s34, 1
        %s445 = scalar_lea.vmem %s3, %s444
        %p446 = pneg %p123
        %p447 = pneg %p120
        %p448 = scmp.lt.s32.totalorder %s34, 1
        %s449 = scalar_select %p448, %s34, 1
        %s450 = smul.addr %s449, 4
        %s451 = smul.addr %s450, 8
        %s452 = scalar_lea.vmem %s4, %s451
        %p453 = pneg %p149
        %p454 = pneg %p146
        %p455 = pneg %p170
        %p456 = pneg %p167
        %p457 = pneg %p191
        %p458 = pneg %p188
        %p459 = pneg %p212
        %p460 = pneg %p209
        %p461 = pneg %p233
        %p462 = pneg %p230
        %p463 = pneg %p259
        %p464 = pneg %p256
        %s465 = sand.u32 %s246, 1
        %s466 = scalar_lea.sflag [#allocation4], %s465
        %s467 = sand.u32 %s246, 1
        %s468 = smul.addr %s467, 32
        %s469 = scalar_lea.vmem [#allocation12], %s468
        %p470 = pneg %p285
        %p471 = pneg %p282
        %s472 = sand.u32 %s272, 1
        %s473 = scalar_lea.sflag [#allocation14], %s472
        %s474 = sand.u32 %s272, 1
        %s475 = smul.addr %s474, 16
        %s476 = scalar_lea.vmem [#allocation13], %s475
        %p477 = scmp.lt.s32.totalorder %s34, 1
        %s478 = scalar_select %p477, %s34, 1
        %s479 = scalar_lea.vmem %s3, %s478
        %p480 = scmp.lt.s32.totalorder %s34, 1
        %s481 = scalar_select %p480, %s34, 1
        %s482 = smul.addr %s481, 4
        %s483 = smul.addr %s482, 8
        %s484 = scalar_lea.vmem %s4, %s483
        %v485 = vld [vmem:[%s405] sm:$0xff]
        %v486 = vld [vmem:[%s405 + $0x8] sm:$0xff]
        %s487 = scalar_lea.vmem %s405, 16 [#allocation2]
        %v488 = vld [vmem:[%s487] sm:$0xff]
        %v489 = vld [vmem:[%s487 + $0x8] sm:$0xff]
        %s490 = scalar_lea.vmem %s405, 32 [#allocation2]
        %v491 = vld [vmem:[%s490] sm:$0xff]
        %v492 = vld [vmem:[%s490 + $0x8] sm:$0xff]
        %s493 = scalar_lea.vmem %s405, 48 [#allocation2]
        %v494 = vld [vmem:[%s493] sm:$0xff]
        %v495 = vld [vmem:[%s493 + $0x8] sm:$0xff]
        %s496 = sld [smem:[#allocation6]]
        %v497 = vstv %s496
        %v498 = vmul.f32 %v485, %v497
        %v499 = vmul.f32 %v486, %v497
        %s500 = sld [smem:[#allocation6 + $0x1]]
        %v501 = vstv %s500
        %v502 = vmul.f32 %v488, %v501
        %v503 = vmul.f32 %v489, %v501
        %v504 = vadd.f32 %v498, %v502
        %v505 = vadd.f32 %v499, %v503
        %s506 = sld [smem:[#allocation6 + $0x2]]
        %v507 = vstv %s506
        %v508 = vmul.f32 %v491, %v507
        %v509 = vmul.f32 %v492, %v507
        %v510 = vadd.f32 %v504, %v508
        %v511 = vadd.f32 %v505, %v509
        %s512 = sld [smem:[#allocation6 + $0x3]]
        %v513 = vstv %s512
        %v514 = vmul.f32 %v494, %v513
        %v515 = vmul.f32 %v495, %v513
        %v516 = vadd.f32 %v510, %v514
        %v517 = vadd.f32 %v511, %v515
        %s518 = sld [smem:[#allocation7]]
        %v519 = vstv %s518
        %v520 = vadd.f32 %v516, %v519
        %v521 = vadd.f32 %v517, %v519
        %v522 = vtanh.pop %v520
        %v523 = vtanh.pop %v521
        %s524 = sld [smem:[#allocation6 + $0x80]]
        %v525 = vstv %s524
        %v526 = vmul.f32 %v485, %v525
        %v527 = vmul.f32 %v486, %v525
        %s528 = sld [smem:[#allocation6 + $0x81]]
        %v529 = vstv %s528
        %v530 = vmul.f32 %v488, %v529
        %v531 = vmul.f32 %v489, %v529
        %v532 = vadd.f32 %v526, %v530
        %v533 = vadd.f32 %v527, %v531
        %s534 = sld [smem:[#allocation6 + $0x82]]
        %v535 = vstv %s534
        %v536 = vmul.f32 %v491, %v535
        %v537 = vmul.f32 %v492, %v535
        %v538 = vadd.f32 %v532, %v536
        %v539 = vadd.f32 %v533, %v537
        %s540 = sld [smem:[#allocation6 + $0x83]]
        %v541 = vstv %s540
        %v542 = vmul.f32 %v494, %v541
        %v543 = vmul.f32 %v495, %v541
        %v544 = vadd.f32 %v538, %v542
        %v545 = vadd.f32 %v539, %v543
        %s546 = sld [smem:[#allocation7 + $0x1]]
        %v547 = vstv %s546
        %v548 = vadd.f32 %v544, %v547
        %v549 = vadd.f32 %v545, %v547
        %v550 = vtanh.pop %v548
        %v551 = vtanh.pop %v549
        %s552 = sld [smem:[#allocation6 + $0x100]]
        %v553 = vstv %s552
        %v554 = vmul.f32 %v485, %v553
        %v555 = vmul.f32 %v486, %v553
        %s556 = sld [smem:[#allocation6 + $0x101]]
        %v557 = vstv %s556
        %v558 = vmul.f32 %v488, %v557
        %v559 = vmul.f32 %v489, %v557
        %v560 = vadd.f32 %v554, %v558
        %v561 = vadd.f32 %v555, %v559
        %s562 = sld [smem:[#allocation6 + $0x102]]
        %v563 = vstv %s562
        %v564 = vmul.f32 %v491, %v563
        %v565 = vmul.f32 %v492, %v563
        %v566 = vadd.f32 %v560, %v564
        %v567 = vadd.f32 %v561, %v565
        %s568 = sld [smem:[#allocation6 + $0x103]]
        %v569 = vstv %s568
        %v570 = vmul.f32 %v494, %v569
        %v571 = vmul.f32 %v495, %v569
        %v572 = vadd.f32 %v566, %v570
        %v573 = vadd.f32 %v567, %v571
        %s574 = sld [smem:[#allocation7 + $0x2]]
        %v575 = vstv %s574
        %v576 = vadd.f32 %v572, %v575
        %v577 = vadd.f32 %v573, %v575
        %v578 = vxor.u32 %v576, 2147483648
        %v579 = vxor.u32 %v577, 2147483648
        %v580 = vmul.f32 %v578, 1.442695
        %v581 = vpow.pop %v580
        %v582 = vmul.f32 %v579, 1.442695
        %v583 = vpow.pop %v582
        %v584 = vadd.f32 %v581, 1.0
        %v585 = vadd.f32 %v583, 1.0
        %v586 = vrcp.pop %v584
        %v587 = vmul.f32 %v584, %v586
        %v588 = vsub.f32 1.0, %v587
        %v589 = vmul.f32 %v586, %v588
        %v590 = vadd.f32 %v586, %v589
        %vm591 = vweird.f32 %v584
        %vm592 = vweird.f32 %v586
        %vm593 = vmor %vm591, %vm592
        %v594 = vsel %vm593, %v586, %v590
        %v595 = vand.u32 2147483647, %v584
        %vm596 = vcmp.eq.f32.partialorder %v595, 8.507059e+37
        %v597 = vand.u32 %v584, 2147483648
        %v598 = vor.u32 1.1754944e-38, %v597
        %v599 = vsel %vm596, %v598, %v594
        %v600 = vmul.f32 1.0, %v599
        %v601 = vrcp.pop %v585
        %v602 = vmul.f32 %v585, %v601
        %v603 = vsub.f32 1.0, %v602
        %v604 = vmul.f32 %v601, %v603
        %v605 = vadd.f32 %v601, %v604
        %vm606 = vweird.f32 %v585
        %vm607 = vweird.f32 %v601
        %vm608 = vmor %vm606, %vm607
        %v609 = vsel %vm608, %v601, %v605
        %v610 = vand.u32 2147483647, %v585
        %vm611 = vcmp.eq.f32.partialorder %v610, 8.507059e+37
        %v612 = vand.u32 %v585, 2147483648
        %v613 = vor.u32 1.1754944e-38, %v612
        %v614 = vsel %vm611, %v613, %v609
        %v615 = vmul.f32 1.0, %v614
        %s616 = sld [smem:[#allocation6 + $0x180]]
        %v617 = vstv %s616
        %v618 = vmul.f32 %v485, %v617
        %v619 = vmul.f32 %v486, %v617
        %s620 = sld [smem:[#allocation6 + $0x181]]
        %v621 = vstv %s620
        %v622 = vmul.f32 %v488, %v621
        %v623 = vmul.f32 %v489, %v621
        %v624 = vadd.f32 %v618, %v622
        %v625 = vadd.f32 %v619, %v623
        %s626 = sld [smem:[#allocation6 + $0x182]]
        %v627 = vstv %s626
        %v628 = vmul.f32 %v491, %v627
        %v629 = vmul.f32 %v492, %v627
        %v630 = vadd.f32 %v624, %v628
        %v631 = vadd.f32 %v625, %v629
        %s632 = sld [smem:[#allocation6 + $0x183]]
        %v633 = vstv %s632
        %v634 = vmul.f32 %v494, %v633
        %v635 = vmul.f32 %v495, %v633
        %v636 = vadd.f32 %v630, %v634
        %v637 = vadd.f32 %v631, %v635
        %s638 = sld [smem:[#allocation7 + $0x3]]
        %v639 = vstv %s638
        %v640 = vadd.f32 %v636, %v639
        %v641 = vadd.f32 %v637, %v639
        %v642 = vxor.u32 %v640, 2147483648
        %v643 = vxor.u32 %v641, 2147483648
        %v644 = vmul.f32 %v642, 1.442695
        %v645 = vpow.pop %v644
        %v646 = vmul.f32 %v643, 1.442695
        %v647 = vpow.pop %v646
        %v648 = vadd.f32 %v645, 1.0
        %v649 = vadd.f32 %v647, 1.0
        %v650 = vrcp.pop %v648
        %v651 = vmul.f32 %v648, %v650
        %v652 = vsub.f32 1.0, %v651
        %v653 = vmul.f32 %v650, %v652
        %v654 = vadd.f32 %v650, %v653
        %vm655 = vweird.f32 %v648
        %vm656 = vweird.f32 %v650
        %vm657 = vmor %vm655, %vm656
        %v658 = vsel %vm657, %v650, %v654
        %v659 = vand.u32 2147483647, %v648
        %vm660 = vcmp.eq.f32.partialorder %v659, 8.507059e+37
        %v661 = vand.u32 %v648, 2147483648
        %v662 = vor.u32 1.1754944e-38, %v661
        %v663 = vsel %vm660, %v662, %v658
        %v664 = vmul.f32 1.0, %v663
        %v665 = vrcp.pop %v649
        %v666 = vmul.f32 %v649, %v665
        %v667 = vsub.f32 1.0, %v666
        %v668 = vmul.f32 %v665, %v667
        %v669 = vadd.f32 %v665, %v668
        %vm670 = vweird.f32 %v649
        %vm671 = vweird.f32 %v665
        %vm672 = vmor %vm670, %vm671
        %v673 = vsel %vm672, %v665, %v669
        %v674 = vand.u32 2147483647, %v649
        %vm675 = vcmp.eq.f32.partialorder %v674, 8.507059e+37
        %v676 = vand.u32 %v649, 2147483648
        %v677 = vor.u32 1.1754944e-38, %v676
        %v678 = vsel %vm675, %v677, %v673
        %v679 = vmul.f32 1.0, %v678
        %v680 = vmul.f32 %v522, %v522
        %v681 = vmul.f32 %v523, %v523
        %v682 = vmul.f32 %v550, %v550
        %v683 = vmul.f32 %v551, %v551
        %v684 = vadd.f32 %v680, %v682
        %v685 = vadd.f32 %v681, %v683
        %v686 = vmul.f32 %v600, %v600
        %v687 = vmul.f32 %v615, %v615
        %v688 = vadd.f32 %v684, %v686
        %v689 = vadd.f32 %v685, %v687
        %v690 = vrsqrt.pop %v688
        %v691 = vmul.f32 %v690, %v688
        %v692 = vmul.f32 %v691, %v690
        %v693 = vmul.f32 0.5, %v692
        %v694 = vsub.f32 1.5, %v693
        %v695 = vmul.f32 %v690, %v694
        %v696 = vmul.f32 %v688, %v695
        %vm697 = vcmp.eq.f32.partialorder %v688, inf
        %v698 = vsel %vm697, %v688, %v696
        %vm699 = vcmp.eq.f32.partialorder %v688, 0.0
        %v700 = vand.u32 %v688, 2147483648
        %v701 = vsel %vm699, %v700, %v698
        %v702 = vrsqrt.pop %v689
        %v703 = vmul.f32 %v702, %v689
        %v704 = vmul.f32 %v703, %v702
        %v705 = vmul.f32 0.5, %v704
        %v706 = vsub.f32 1.5, %v705
        %v707 = vmul.f32 %v702, %v706
        %v708 = vmul.f32 %v689, %v707
        %vm709 = vcmp.eq.f32.partialorder %v689, inf
        %v710 = vsel %vm709, %v689, %v708
        %vm711 = vcmp.eq.f32.partialorder %v689, 0.0
        %v712 = vand.u32 %v689, 2147483648
        %v713 = vsel %vm711, %v712, %v710
        %v714 = vmax.f32 %v701, 1e-12
        %v715 = vmax.f32 %v713, 1e-12
        %v716 = vmul.f32 %v664, %v714
        %v717 = vmul.f32 %v679, %v715
        %v718 = vld [vmem:[#allocation9] sm:$0xff]
        %v719 = vld [vmem:[#allocation9 + $0x8] sm:$0xff]
        %vm720 = vcmask 130048
        %v722 = vsel %vm720, %v522, 0
        %v725 = vsel %vm720, %v523, 0
        %v728 = vsel %vm720, %v550, 0
        %v731 = vsel %vm720, %v551, 0
        %v734 = vsel %vm720, %v600, 0
        %v737 = vsel %vm720, %v615, 0
        %v740 = vsel %vm720, %v716, 0
        %v743 = vsel %vm720, %v717, 0
        %745 = vmatpush.msra.mxu0 0.0
        %746 = vmatpush.msra.mxu0 0.0
        %747 = vmatpush.msra.mxu0 0.0
        %748 = vmatpush.msra.mxu0 0.0
        %749 = vmatpush.msra.mxu0 0.0
        %750 = vmatpush.msra.mxu0 0.0
        %751 = vmatpush.msra.mxu0 0.0
        %752 = vmatpush.msra.mxu0 0.0
        %753 = vmatpush.msra.mxu0 0.0
        %754 = vmatpush.msra.mxu0 0.0
        %755 = vmatpush.msra.mxu0 0.0
        %756 = vmatpush.msra.mxu0 0.0
        %757 = vmatpush.msra.mxu0 0.0
        %758 = vmatpush.msra.mxu0 0.0
        %759 = vmatpush.msra.mxu0 %v719
        %760 = vmatpush.msra.mxu0 %v718
        %761 = vmatmul.f32.gmra.mxu0 %v722
        %v762 = vpop.f32.mrf.mxu0
        %v763 = vadd.f32 0.0, %v762
        %764 = vmatmul.f32.gmra.mxu0 %v725
        %v765 = vpop.f32.mrf.mxu0
        %v766 = vadd.f32 0.0, %v765
        %767 = vmatmul.f32.gmra.mxu0 %v728
        %v768 = vpop.f32.mrf.mxu0
        %v769 = vadd.f32 0.0, %v768
        %770 = vmatmul.f32.gmra.mxu0 %v731
        %v771 = vpop.f32.mrf.mxu0
        %v772 = vadd.f32 0.0, %v771
        %773 = vmatmul.f32.gmra.mxu0 %v734
        %v774 = vpop.f32.mrf.mxu0
        %v775 = vadd.f32 0.0, %v774
        %776 = vmatmul.f32.gmra.mxu0 %v737
        %v777 = vpop.f32.mrf.mxu0
        %v778 = vadd.f32 0.0, %v777
        %779 = vmatmul.f32.gmra.mxu0 %v740
        %v780 = vpop.f32.mrf.mxu0
        %v781 = vadd.f32 0.0, %v780
        %782 = vmatmul.f32.gmra.mxu0 %v743
        %v783 = vpop.f32.mrf.mxu0
        %v784 = vadd.f32 0.0, %v783
        %785 = vdwg.mxu0
        %v786 = vld [vmem:[%s6] sm:$0xff]
        %v787 = vld [vmem:[%s6 + $0x8] sm:$0xff]
        %v788 = vld [vmem:[%s6 + $0x10] sm:$0xff]
        %v789 = vld [vmem:[%s6 + $0x18] sm:$0xff]
        %v791 = vsel %vm720, %v786, 0
        %v794 = vsel %vm720, %v787, 0
        %v797 = vsel %vm720, %v788, 0
        %v800 = vsel %vm720, %v789, 0
        %802 = vmatpush.msra.mxu0 0.0
        %803 = vmatpush.msra.mxu0 0.0
        %804 = vmatpush.msra.mxu0 0.0
        %805 = vmatpush.msra.mxu0 0.0
        %806 = vmatpush.msra.mxu0 0.0
        %807 = vmatpush.msra.mxu0 0.0
        %808 = vmatpush.msra.mxu0 0.0
        %809 = vmatpush.msra.mxu0 0.0
        %810 = vmatpush.msra.mxu0 0.0
        %811 = vmatpush.msra.mxu0 0.0
        %812 = vmatpush.msra.mxu0 0.0
        %813 = vmatpush.msra.mxu0 0.0
        %814 = vmatpush.msra.mxu0 0.0
        %815 = vmatpush.msra.mxu0 0.0
        %816 = vmatpush.msra.mxu0 %v766
        %817 = vmatpush.msra.mxu0 %v763
        %818 = vmatmul.f32.gmra.mxu0 %v791
        %v819 = vpop.f32.mrf.mxu0
        %v820 = vadd.f32 0.0, %v819
        %821 = vmatmul.f32.gmra.mxu0 %v794
        %v822 = vpop.f32.mrf.mxu0
        %v823 = vadd.f32 0.0, %v822
        %824 = vmatmul.f32.gmra.mxu0 %v797
        %v825 = vpop.f32.mrf.mxu0
        %v826 = vadd.f32 0.0, %v825
        %827 = vmatmul.f32.gmra.mxu0 %v800
        %v828 = vpop.f32.mrf.mxu0
        %v829 = vadd.f32 0.0, %v828
        %830 = vdwg.mxu0
        %831 = vmatpush.msra.mxu0 0.0
        %832 = vmatpush.msra.mxu0 0.0
        %833 = vmatpush.msra.mxu0 0.0
        %834 = vmatpush.msra.mxu0 0.0
        %835 = vmatpush.msra.mxu0 0.0
        %836 = vmatpush.msra.mxu0 0.0
        %837 = vmatpush.msra.mxu0 0.0
        %838 = vmatpush.msra.mxu0 0.0
        %839 = vmatpush.msra.mxu0 0.0
        %840 = vmatpush.msra.mxu0 0.0
        %841 = vmatpush.msra.mxu0 0.0
        %842 = vmatpush.msra.mxu0 0.0
        %843 = vmatpush.msra.mxu0 0.0
        %844 = vmatpush.msra.mxu0 0.0
        %845 = vmatpush.msra.mxu0 %v772
        %846 = vmatpush.msra.mxu0 %v769
        %847 = vmatmul.f32.gmra.mxu0 %v791
        %v848 = vpop.f32.mrf.mxu0
        %v849 = vadd.f32 0.0, %v848
        %850 = vmatmul.f32.gmra.mxu0 %v794
        %v851 = vpop.f32.mrf.mxu0
        %v852 = vadd.f32 0.0, %v851
        %853 = vmatmul.f32.gmra.mxu0 %v797
        %v854 = vpop.f32.mrf.mxu0
        %v855 = vadd.f32 0.0, %v854
        %856 = vmatmul.f32.gmra.mxu0 %v800
        %v857 = vpop.f32.mrf.mxu0
        %v858 = vadd.f32 0.0, %v857
        %859 = vdwg.mxu0
        %860 = vmatpush.msra.mxu0 0.0
        %861 = vmatpush.msra.mxu0 0.0
        %862 = vmatpush.msra.mxu0 0.0
        %863 = vmatpush.msra.mxu0 0.0
        %864 = vmatpush.msra.mxu0 0.0
        %865 = vmatpush.msra.mxu0 0.0
        %866 = vmatpush.msra.mxu0 0.0
        %867 = vmatpush.msra.mxu0 0.0
        %868 = vmatpush.msra.mxu0 0.0
        %869 = vmatpush.msra.mxu0 0.0
        %870 = vmatpush.msra.mxu0 0.0
        %871 = vmatpush.msra.mxu0 0.0
        %872 = vmatpush.msra.mxu0 0.0
        %873 = vmatpush.msra.mxu0 0.0
        %874 = vmatpush.msra.mxu0 %v778
        %875 = vmatpush.msra.mxu0 %v775
        %876 = vmatmul.f32.gmra.mxu0 %v791
        %v877 = vpop.f32.mrf.mxu0
        %v878 = vadd.f32 0.0, %v877
        %879 = vmatmul.f32.gmra.mxu0 %v794
        %v880 = vpop.f32.mrf.mxu0
        %v881 = vadd.f32 0.0, %v880
        %882 = vmatmul.f32.gmra.mxu0 %v797
        %v883 = vpop.f32.mrf.mxu0
        %v884 = vadd.f32 0.0, %v883
        %885 = vmatmul.f32.gmra.mxu0 %v800
        %v886 = vpop.f32.mrf.mxu0
        %v887 = vadd.f32 0.0, %v886
        %888 = vdwg.mxu0
        %889 = vmatpush.msra.mxu0 0.0
        %890 = vmatpush.msra.mxu0 0.0
        %891 = vmatpush.msra.mxu0 0.0
        %892 = vmatpush.msra.mxu0 0.0
        %893 = vmatpush.msra.mxu0 0.0
        %894 = vmatpush.msra.mxu0 0.0
        %895 = vmatpush.msra.mxu0 0.0
        %896 = vmatpush.msra.mxu0 0.0
        %897 = vmatpush.msra.mxu0 0.0
        %898 = vmatpush.msra.mxu0 0.0
        %899 = vmatpush.msra.mxu0 0.0
        %900 = vmatpush.msra.mxu0 0.0
        %901 = vmatpush.msra.mxu0 0.0
        %902 = vmatpush.msra.mxu0 0.0
        %903 = vmatpush.msra.mxu0 %v784
        %904 = vmatpush.msra.mxu0 %v781
        %905 = vmatmul.f32.gmra.mxu0 %v791
        %v906 = vpop.f32.mrf.mxu0
        %v907 = vadd.f32 0.0, %v906
        %908 = vmatmul.f32.gmra.mxu0 %v794
        %v909 = vpop.f32.mrf.mxu0
        %v910 = vadd.f32 0.0, %v909
        %911 = vmatmul.f32.gmra.mxu0 %v797
        %v912 = vpop.f32.mrf.mxu0
        %v913 = vadd.f32 0.0, %v912
        %914 = vmatmul.f32.gmra.mxu0 %v800
        %v915 = vpop.f32.mrf.mxu0
        %v916 = vadd.f32 0.0, %v915
        %917 = vdwg.mxu0
        %v918 = vld [vmem:[%s479] sm:$0x1]
        %v919 = vld [vmem:[%s484] sm:$0xff]
        %v920 = vld [vmem:[%s484 + $0x8] sm:$0xff]
        %v921 = vld [vmem:[%s484 + $0x10] sm:$0xff]
        %v922 = vld [vmem:[%s484 + $0x18] sm:$0xff]
        %v923 = vmul.f32 %v918, %v918
        %v924 = vmul.f32 %v919, %v919
        %v925 = vmul.f32 %v920, %v920
        %v926 = vmul.f32 %v921, %v921
        %v927 = vmul.f32 %v922, %v922
        %v929 = vperm.slane %v923, 0
        %932 = vset.pattern.permute.xlu0 0
        %933 = vperm.xlu0 %932, %v924
        %v934 = vpop.permute.xlu0 %933
        %937 = vset.pattern.permute.xlu0 0
        %938 = vperm.xlu0 %937, %v925
        %v939 = vpop.permute.xlu0 %938
        %942 = vset.pattern.permute.xlu0 0
        %943 = vperm.xlu0 %942, %v926
        %v944 = vpop.permute.xlu0 %943
        %947 = vset.pattern.permute.xlu0 0
        %948 = vperm.xlu0 %947, %v927
        %v949 = vpop.permute.xlu0 %948
        %v951 = vadd.f32 %v929, %v934
        %v952 = vadd.f32 %v929, %v939
        %v953 = vadd.f32 %v929, %v944
        %v954 = vadd.f32 %v929, %v949
        %v955 = vadd.f32 %v951, 1.0
        %v956 = vadd.f32 %v952, 1.0
        %v957 = vadd.f32 %v953, 1.0
        %v958 = vadd.f32 %v954, 1.0
        %v959 = vrsqrt.pop %v955
        %v960 = vmul.f32 %v959, %v955
        %v961 = vmul.f32 %v960, %v959
        %v962 = vmul.f32 0.5, %v961
        %v963 = vsub.f32 1.5, %v962
        %v964 = vmul.f32 %v959, %v963
        %v965 = vmul.f32 %v955, %v964
        %vm966 = vcmp.eq.f32.partialorder %v955, inf
        %v967 = vsel %vm966, %v955, %v965
        %vm968 = vcmp.eq.f32.partialorder %v955, 0.0
        %v969 = vand.u32 %v955, 2147483648
        %v970 = vsel %vm968, %v969, %v967
        %v971 = vrsqrt.pop %v956
        %v972 = vmul.f32 %v971, %v956
        %v973 = vmul.f32 %v972, %v971
        %v974 = vmul.f32 0.5, %v973
        %v975 = vsub.f32 1.5, %v974
        %v976 = vmul.f32 %v971, %v975
        %v977 = vmul.f32 %v956, %v976
        %vm978 = vcmp.eq.f32.partialorder %v956, inf
        %v979 = vsel %vm978, %v956, %v977
        %vm980 = vcmp.eq.f32.partialorder %v956, 0.0
        %v981 = vand.u32 %v956, 2147483648
        %v982 = vsel %vm980, %v981, %v979
        %v983 = vrsqrt.pop %v957
        %v984 = vmul.f32 %v983, %v957
        %v985 = vmul.f32 %v984, %v983
        %v986 = vmul.f32 0.5, %v985
        %v987 = vsub.f32 1.5, %v986
        %v988 = vmul.f32 %v983, %v987
        %v989 = vmul.f32 %v957, %v988
        %vm990 = vcmp.eq.f32.partialorder %v957, inf
        %v991 = vsel %vm990, %v957, %v989
        %vm992 = vcmp.eq.f32.partialorder %v957, 0.0
        %v993 = vand.u32 %v957, 2147483648
        %v994 = vsel %vm992, %v993, %v991
        %v995 = vrsqrt.pop %v958
        %v996 = vmul.f32 %v995, %v958
        %v997 = vmul.f32 %v996, %v995
        %v998 = vmul.f32 0.5, %v997
        %v999 = vsub.f32 1.5, %v998
        %v1000 = vmul.f32 %v995, %v999
        %v1001 = vmul.f32 %v958, %v1000
        %vm1002 = vcmp.eq.f32.partialorder %v958, inf
        %v1003 = vsel %vm1002, %v958, %v1001
        %vm1004 = vcmp.eq.f32.partialorder %v958, 0.0
        %v1005 = vand.u32 %v958, 2147483648
        %v1006 = vsel %vm1004, %v1005, %v1003
        %v1008 = vperm.slane %v918, 0
        %v1010 = vmul.f32 %v820, %v1008
        %v1011 = vmul.f32 %v823, %v1008
        %v1012 = vmul.f32 %v826, %v1008
        %v1013 = vmul.f32 %v829, %v1008
        %1015 = vset.pattern.permute.xlu0 0
        %1016 = vperm.xlu0 %1015, %v919
        %v1017 = vpop.permute.xlu0 %1016
        %1020 = vset.pattern.permute.xlu0 0
        %1021 = vperm.xlu0 %1020, %v920
        %v1022 = vpop.permute.xlu0 %1021
        %1025 = vset.pattern.permute.xlu0 0
        %1026 = vperm.xlu0 %1025, %v921
        %v1027 = vpop.permute.xlu0 %1026
        %1030 = vset.pattern.permute.xlu0 0
        %1031 = vperm.xlu0 %1030, %v922
        %v1032 = vpop.permute.xlu0 %1031
        %v1034 = vmul.f32 %v849, %v1017
        %v1035 = vmul.f32 %v852, %v1022
        %v1036 = vmul.f32 %v855, %v1027
        %v1037 = vmul.f32 %v858, %v1032
        %v1038 = vadd.f32 %v1010, %v1034
        %v1039 = vadd.f32 %v1011, %v1035
        %v1040 = vadd.f32 %v1012, %v1036
        %v1041 = vadd.f32 %v1013, %v1037
        %v1042 = vadd.f32 %v1038, %v878
        %v1043 = vadd.f32 %v1039, %v881
        %v1044 = vadd.f32 %v1040, %v884
        %v1045 = vadd.f32 %v1041, %v887
        %v1046 = vmul.f32 %v907, %v970
        %v1047 = vmul.f32 %v910, %v982
        %v1048 = vmul.f32 %v913, %v994
        %v1049 = vmul.f32 %v916, %v1006
        %v1050 = vrcp.pop %v1042
        %v1051 = vrcp.pop %v1043
        %v1052 = vrcp.pop %v1044
        %v1053 = vrcp.pop %v1045
        %v1054 = vmul.f32 %v1042, %v1050
        %v1055 = vmul.f32 %v1043, %v1051
        %v1056 = vmul.f32 %v1044, %v1052
        %v1057 = vmul.f32 %v1045, %v1053
        %v1058 = vsub.f32 2.0, %v1054
        %v1059 = vsub.f32 2.0, %v1055
        %v1060 = vsub.f32 2.0, %v1056
        %v1061 = vsub.f32 2.0, %v1057
        %v1062 = vmul.f32 %v1050, %v1058
        %v1063 = vmul.f32 %v1051, %v1059
        %v1064 = vmul.f32 %v1052, %v1060
        %v1065 = vmul.f32 %v1053, %v1061
        %v1066 = vmul.f32 %v1046, %v1062
        %v1067 = vmul.f32 %v1047, %v1063
        %v1068 = vmul.f32 %v1048, %v1064
        %v1069 = vmul.f32 %v1049, %v1065
        %vm1070 = vcmask 261120
        %1071 = vst.msk [vmem:[%s469] sm:$0xff] %vm1070, %v1066
        %1072 = vst.msk [vmem:[%s469 + $0x8] sm:$0xff] %vm1070, %v1067
        %1073 = vst.msk [vmem:[%s469 + $0x10] sm:$0xff] %vm1070, %v1068
        %1074 = vst.msk [vmem:[%s469 + $0x18] sm:$0xff] %vm1070, %v1069
        %v1075 = vld [vmem:[#allocation11] sm:$0xff]
        %v1076 = vld [vmem:[#allocation11 + $0x8] sm:$0xff]
        %v1078 = vsel %vm1070, %v1075, 0
        %v1081 = vsel %vm1070, %v1076, 0
        %1083 = vmatpush.msra.mxu0 0.0
        %1084 = vmatpush.msra.mxu0 0.0
        %1085 = vmatpush.msra.mxu0 0.0
        %1086 = vmatpush.msra.mxu0 0.0
        %1087 = vmatpush.msra.mxu0 0.0
        %1088 = vmatpush.msra.mxu0 0.0
        %1089 = vmatpush.msra.mxu0 0.0
        %1090 = vmatpush.msra.mxu0 0.0
        %1091 = vmatpush.msra.mxu0 0.0
        %1092 = vmatpush.msra.mxu0 0.0
        %1093 = vmatpush.msra.mxu0 0.0
        %1094 = vmatpush.msra.mxu0 0.0
        %1095 = vmatpush.msra.mxu0 %v1069
        %1096 = vmatpush.msra.mxu0 %v1068
        %1097 = vmatpush.msra.mxu0 %v1067
        %1098 = vmatpush.msra.mxu0 %v1066
        %1099 = vmatmul.f32.gmra.mxu0 %v1078
        %v1100 = vpop.f32.mrf.mxu0
        %v1101 = vadd.f32 0.0, %v1100
        %1102 = vmatmul.f32.gmra.mxu0 %v1081
        %v1103 = vpop.f32.mrf.mxu0
        %v1104 = vadd.f32 0.0, %v1103
        %1105 = vdwg.mxu0
        %v1106 = vld [vmem:[%s8] sm:$0xff]
        %v1107 = vld [vmem:[%s8 + $0x8] sm:$0xff]
        %v1108 = vld [vmem:[%s8 + $0x10] sm:$0xff]
        %v1109 = vld [vmem:[%s8 + $0x18] sm:$0xff]
        %v1111 = vsel %vm1070, %v1101, 0
        %v1114 = vsel %vm1070, %v1104, 0
        %1116 = vmatpush.msra.mxu0 0.0
        %1117 = vmatpush.msra.mxu0 0.0
        %1118 = vmatpush.msra.mxu0 0.0
        %1119 = vmatpush.msra.mxu0 0.0
        %1120 = vmatpush.msra.mxu0 0.0
        %1121 = vmatpush.msra.mxu0 0.0
        %1122 = vmatpush.msra.mxu0 0.0
        %1123 = vmatpush.msra.mxu0 0.0
        %1124 = vmatpush.msra.mxu0 0.0
        %1125 = vmatpush.msra.mxu0 0.0
        %1126 = vmatpush.msra.mxu0 0.0
        %1127 = vmatpush.msra.mxu0 0.0
        %1128 = vmatpush.msra.mxu0 %v1109
        %1129 = vmatpush.msra.mxu0 %v1108
        %1130 = vmatpush.msra.mxu0 %v1107
        %1131 = vmatpush.msra.mxu0 %v1106
        %1132 = vmatmul.f32.gmra.mxu0 %v1111
        %v1133 = vpop.f32.mrf.mxu0
        %v1134 = vadd.f32 0.0, %v1133
        %1135 = vmatmul.f32.gmra.mxu0 %v1114
        %v1136 = vpop.f32.mrf.mxu0
        %v1137 = vadd.f32 0.0, %v1136
        %1138 = vdwg.mxu0
        %1139 = vst.msk [vmem:[%s476] sm:$0xff] %vm720, %v1134
        %1140 = vst.msk [vmem:[%s476 + $0x8] sm:$0xff] %vm720, %v1137
        %s1141 = sand.u32 %s246, 1
        %s1142 = scalar_lea.sflag [#allocation4], %s1141
        %s1143 = sand.u32 %s246, 1
        %s1144 = smul.addr %s1143, 32
        %s1145 = scalar_lea.vmem [#allocation12], %s1144
        %s1146 = sand.u32 %s272, 1
        %s1147 = scalar_lea.sflag [#allocation14], %s1146
        %s1148 = sand.u32 %s272, 1
        %s1149 = smul.addr %s1148, 16
        %s1150 = scalar_lea.vmem [#allocation13], %s1149
        // Predicated region
        $region77: #{plane_depth_forward.1} parent=55 // pred_check
          %p1151 = pneg %p256
        $region78: #{plane_depth_forward.1} parent=55 // pred_check_branch
          %1153 = sbr.rel (%p1151) target = $region80
        $region79: #{plane_depth_forward.1} parent=55 // pred_region
          %1155 = vsyncadd %s1142, 0
          %s1156 = smul.addr %s34, 4
          %s1157 = smul.addr %s1156, 8
          %s1158 = scalar_lea.hbm %s9, %s1157
          %s1159 = sshll.u32 %s1145, 4
          %s1160 = int_to_ptr.vmem [resolvable:$true] %s1159
          %s1161 = sshll.u32 %s1158, 4
          %s1162 = int_to_ptr.hbm [resolvable:$true] %s1161
          %1167 = dma.vmem_to_hbm [thread:$0]  %s1160, 512, %s1162, %s1142, 128, 128, 8
        $region80: #{plane_depth_forward.1} parent=55 // pred_fallthru
          _
        // Predicated region
        $region81: #{plane_depth_forward.1} parent=55 // pred_check
          %p1168 = pneg %p282
        $region82: #{plane_depth_forward.1} parent=55 // pred_check_branch
          %1170 = sbr.rel (%p1168) target = $region84
        $region83: #{plane_depth_forward.1} parent=55 // pred_region
          %1172 = vsyncadd %s1147, 0
          %s1173 = smul.addr %s34, 2
          %s1174 = smul.addr %s1173, 8
          %s1175 = scalar_lea.hbm %s10, %s1174
          %s1176 = sshll.u32 %s1150, 4
          %s1177 = int_to_ptr.vmem [resolvable:$true] %s1176
          %s1178 = sshll.u32 %s1175, 4
          %s1179 = int_to_ptr.hbm [resolvable:$true] %s1178
          %1184 = dma.vmem_to_hbm [thread:$0]  %s1177, 256, %s1179, %s1147, 128, 128, 8
        $region84: #{plane_depth_forward.1} parent=55 // pred_fallthru
          _
      $region56: #{plane_depth_forward.1} parent=5 // pred_fallthru
        _
      %p1185 = scmp.le.s32.totalorder 2, %s29
      // Predicated region
      $region85: #{plane_depth_forward.1} parent=5 // pred_check
        %p1186 = pneg %p1185
      $region86: #{plane_depth_forward.1} parent=5 // pred_check_branch
        %1188 = sbr.rel (%p1186) target = $region88
      $region87: #{plane_depth_forward.1} parent=5 // pred_region
        %s1189 = ssub.s32 %s29, 2
        // Predicated region
        $region89: #{plane_depth_forward.1} parent=87 // pred_check
          %p1190 = pneg %p262
        $region90: #{plane_depth_forward.1} parent=87 // pred_check_branch
          %1192 = sbr.rel (%p1190) target = $region92
        $region91: #{plane_depth_forward.1} parent=87 // pred_region
          %s1193 = sand.u32 %s247, 1
          %s1194 = scalar_lea.sflag [#allocation4], %s1193
          %s1195 = sand.u32 %s247, 1
          %s1196 = smul.addr %s1195, 32
          %s1197 = scalar_lea.vmem [#allocation12], %s1196
          %1199 = dma.done %s1194, 512
        $region92: #{plane_depth_forward.1} parent=87 // pred_fallthru
          _
        // Predicated region
        $region93: #{plane_depth_forward.1} parent=87 // pred_check
          %p1200 = pneg %p288
        $region94: #{plane_depth_forward.1} parent=87 // pred_check_branch
          %1202 = sbr.rel (%p1200) target = $region96
        $region95: #{plane_depth_forward.1} parent=87 // pred_region
          %s1203 = sand.u32 %s273, 1
          %s1204 = scalar_lea.sflag [#allocation14], %s1203
          %s1205 = sand.u32 %s273, 1
          %s1206 = smul.addr %s1205, 16
          %s1207 = scalar_lea.vmem [#allocation13], %s1206
          %1209 = dma.done %s1204, 256
        $region96: #{plane_depth_forward.1} parent=87 // pred_fallthru
          _
      $region88: #{plane_depth_forward.1} parent=5 // pred_fallthru
        _
    $region6: #{plane_depth_forward.1} parent=1 // loop_footer
      %s33 = sadd.s32 1, %s29
    $region7: #{plane_depth_forward.1} parent=1 // loop_footer_branch
      %28 = sbr.rel target = $region3
    $region8: #{plane_depth_forward.1} parent=1 // loop_exit
      _
    %1210 = vsyncpa [#allocation3], 1
    %s1211 = scalar_lea.sflag [#allocation3], 1
    %1212 = vsyncpa %s1211, 1
    %1213 = vsyncpa [#allocation10], 1
    %1214 = vsyncpa [#allocation4], 1
    %s1215 = scalar_lea.sflag [#allocation4], 1
    %1216 = vsyncpa %s1215, 1
    %1217 = vsyncpa [#allocation14], 1
    %s1218 = scalar_lea.sflag [#allocation14], 1
    %1219 = vsyncpa %s1218, 1
    %1220 = vsyncpa [#allocation5], 1
    %s1221 = scalar_lea.sflag [#allocation5], 1
    %1222 = vsyncpa %s1221, 1
    %1223 = vsyncpa [#allocation8], 1

</llo_original>
